<compile_context>
chip_gen: v7x
topology: tpu7x:2x2x1
jax: 0.10.0
libtpu: 0.0.40
codegen_flags: <defaults>
</compile_context>

<pallas_src>
import jax
import jax.numpy as jnp
from jax.experimental import pallas as pl
from jax.experimental.pallas import tpu as pltpu

HIDDEN = 512


def _leaky_relu(x, slope=0.2):
    # mul + max (2 VALU ops) instead of compare + select.
    return jnp.maximum(x, slope * x)


def discriminator_kernel(x_ref,
                         w1_ref, b1_ref,
                         w2_ref, b2_ref,
                         w3_ref, b3_ref,
                         w4_ref, b4_ref,
                         out_ref):
    # Hot path: three [TB,512]-ish bf16 matmuls with f32 accumulation, fused
    # with bias + LeakyReLU. Final 512->1 layer is a lane-wise VPU multiply
    # plus an XLU row reduction (no N=1 MXU matmul, no extra MXU round-trip).
    x = x_ref[...].astype(jnp.bfloat16)

    h = jnp.dot(x, w1_ref[...], preferred_element_type=jnp.float32) + b1_ref[...]
    h = _leaky_relu(h)

    h = jnp.dot(h.astype(jnp.bfloat16), w2_ref[...],
                preferred_element_type=jnp.float32) + b2_ref[...]
    h = _leaky_relu(h)

    h = jnp.dot(h.astype(jnp.bfloat16), w3_ref[...],
                preferred_element_type=jnp.float32) + b3_ref[...]
    h = _leaky_relu(h)

    # Final layer: y = h @ w4 + b4, with w4 presented as a [1, HIDDEN] f32 row.
    w4_row = w4_ref[...]                                   # [1, HIDDEN] f32
    y = jnp.sum(h * w4_row, axis=-1, keepdims=True) + b4_ref[...]

    out_ref[...] = y.astype(out_ref.dtype)


def _pick_batch_tile(B):
    for tb in (512, 256, 128, 64, 32, 16, 8):
        if B % tb == 0:
            return tb
    return B  # block == full batch dim (always legal)


def discriminator_forward(x, params):
    """x: [B, D] float32. params: dict of f32 weights/biases. Returns [B, 1]."""
    B, D = x.shape
    TB = _pick_batch_tile(B)
    grid = (pl.cdiv(B, TB),)

    # bf16 weights for the big layers (HBM-bound term); biases and the tiny
    # final-layer row stay f32 so all post-matmul math is f32.
    w1 = params["w1"].astype(jnp.bfloat16)
    w2 = params["w2"].astype(jnp.bfloat16)
    w3 = params["w3"].astype(jnp.bfloat16)
    w4_row = params["w4"].T              # [1, HIDDEN] f32
    b1, b2, b3, b4 = params["b1"], params["b2"], params["b3"], params["b4"]

    # Explicit BlockSpecs (no late-binding lambda-over-loop-var). The batch
    # tile moves with the grid; every weight/bias returns the same block index
    # each step, so it stays resident in VMEM (fetched once).
    batch_map = lambda i: (i, 0)
    const_map = lambda i: (0, 0)
    in_specs = [
        pl.BlockSpec((TB, D), batch_map),                  # x
        pl.BlockSpec((D, HIDDEN), const_map),              # w1
        pl.BlockSpec((1, HIDDEN), const_map),              # b1
        pl.BlockSpec((HIDDEN, HIDDEN), const_map),         # w2
        pl.BlockSpec((1, HIDDEN), const_map),              # b2
        pl.BlockSpec((HIDDEN, HIDDEN), const_map),         # w3
        pl.BlockSpec((1, HIDDEN), const_map),              # b3
        pl.BlockSpec((1, HIDDEN), const_map),              # w4 (row form)
        pl.BlockSpec((1, 1), const_map),                   # b4
    ]
    out_spec = pl.BlockSpec((TB, 1), batch_map)

    return pl.pallas_call(
        discriminator_kernel,
        out_shape=jax.ShapeDtypeStruct((B, 1), jnp.float32),
        grid=grid,
        in_specs=in_specs,
        out_specs=out_spec,
        compiler_params=pltpu.CompilerParams(
            dimension_semantics=("parallel",)),
    )(x, w1, b1, w2, b2, w3, b3, w4_row, b4)


def init_params(key, input_dim):
    """Deterministic init mimicking PyTorch Linear default (U(-1/sqrt(fan_in), +))."""
    dims = [(input_dim, HIDDEN), (HIDDEN, HIDDEN), (HIDDEN, HIDDEN), (HIDDEN, 1)]
    params = {}
    keys = jax.random.split(key, 2 * len(dims))
    for i, (fan_in, fan_out) in enumerate(dims):
        bound = 1.0 / jnp.sqrt(jnp.float32(fan_in))
        params[f"w{i+1}"] = jax.random.uniform(
            keys[2 * i], (fan_in, fan_out), jnp.float32, -bound, bound)
        params[f"b{i+1}"] = jax.random.uniform(
            keys[2 * i + 1], (1, fan_out), jnp.float32, -bound, bound)
    return params


def reference_forward(x, params):
    h = x @ params["w1"] + params["b1"]
    h = jnp.where(h > 0, h, 0.2 * h)
    h = h @ params["w2"] + params["b2"]
    h = jnp.where(h > 0, h, 0.2 * h)
    h = h @ params["w3"] + params["b3"]
    h = jnp.where(h > 0, h, 0.2 * h)
    return h @ params["w4"] + params["b4"]


if __name__ == "__main__":
    key = jax.random.PRNGKey(0)
    k_param, k_x = jax.random.split(key)

    batch = 8
    input_dim = 32  # Discriminator(input_shape=32)

    params = init_params(k_param, input_dim)
    x = jax.random.normal(k_x, (batch, input_dim), jnp.float32)

    out = discriminator_forward(x, params)
    out = jax.block_until_ready(out)

    ref = reference_forward(x, params)
    assert out.shape == (batch, 1), out.shape
    # bf16 weights/activations in the matmuls => loosened tolerance vs the
    # pure-f32 reference.
    assert jnp.allclose(out, ref, atol=5e-2, rtol=5e-2), (
        float(jnp.max(jnp.abs(out - ref))))

    print("KERNEL_OK")
</pallas_src>

<mosaic_0001>
module attributes {stable_mosaic.version = 11 : i64} {
  func.func @discriminator_kernel(%arg0: i32, %arg1: memref<8x32xf32, #tpu.memory_space<vmem>>, %arg2: memref<32x512xbf16, #tpu.memory_space<vmem>>, %arg3: memref<1x512xf32, #tpu.memory_space<vmem>>, %arg4: memref<512x512xbf16, #tpu.memory_space<vmem>>, %arg5: memref<1x512xf32, #tpu.memory_space<vmem>>, %arg6: memref<512x512xbf16, #tpu.memory_space<vmem>>, %arg7: memref<1x512xf32, #tpu.memory_space<vmem>>, %arg8: memref<1x512xf32, #tpu.memory_space<vmem>>, %arg9: memref<1x1xf32, #tpu.memory_space<vmem>>, %arg10: memref<8x1xf32, #tpu.memory_space<vmem>>) attributes {dimension_semantics = [#tpu.dimension_semantics<parallel>], iteration_bounds = array<i64: 1>, scalar_prefetch = 0 : i64, scratch_operands = 0 : i64, tpu.core_type = #tpu.core_type<tc>, window_params = [{transform_indices = @transform_0, window_bounds = array<i64: 8, 32>}, {pipeline_mode = #tpu.pipeline_mode<synchronous>, transform_indices = @transform_1, window_bounds = array<i64: 32, 512>}, {pipeline_mode = #tpu.pipeline_mode<synchronous>, transform_indices = @transform_2, window_bounds = array<i64: 1, 512>}, {pipeline_mode = #tpu.pipeline_mode<synchronous>, transform_indices = @transform_3, window_bounds = array<i64: 512, 512>}, {pipeline_mode = #tpu.pipeline_mode<synchronous>, transform_indices = @transform_4, window_bounds = array<i64: 1, 512>}, {pipeline_mode = #tpu.pipeline_mode<synchronous>, transform_indices = @transform_5, window_bounds = array<i64: 512, 512>}, {pipeline_mode = #tpu.pipeline_mode<synchronous>, transform_indices = @transform_6, window_bounds = array<i64: 1, 512>}, {pipeline_mode = #tpu.pipeline_mode<synchronous>, transform_indices = @transform_7, window_bounds = array<i64: 1, 512>}, {pipeline_mode = #tpu.pipeline_mode<synchronous>, transform_indices = @transform_8, window_bounds = array<i64: 1, 1>}, {transform_indices = @transform_9, window_bounds = array<i64: 8, 1>}]} {
    %c0 = arith.constant 0 : index
    %c0_0 = arith.constant 0 : index
    %0 = vector.load %arg1[%c0, %c0_0] : memref<8x32xf32, #tpu.memory_space<vmem>>, vector<8x32xf32>
    %1 = arith.truncf %0 : vector<8x32xf32> to vector<8x32xbf16>
    %c0_1 = arith.constant 0 : index
    %c0_2 = arith.constant 0 : index
    %2 = vector.load %arg2[%c0_1, %c0_2] : memref<32x512xbf16, #tpu.memory_space<vmem>>, vector<32x512xbf16>
    %cst = arith.constant dense<0.000000e+00> : vector<8x512xf32>
    %3 = tpu.matmul %1, %2, %cst {dimension_numbers = #tpu.dot_dimension_numbers<[1], [0], [0], [1], [0, 0, 1, 1], [], []>} : vector<8x32xbf16>, vector<32x512xbf16>, vector<8x512xf32> -> vector<8x512xf32>
    %c0_3 = arith.constant 0 : index
    %c0_4 = arith.constant 0 : index
    %4 = vector.load %arg3[%c0_3, %c0_4] : memref<1x512xf32, #tpu.memory_space<vmem>>, vector<1x512xf32>
    %5 = vector.broadcast %4 : vector<1x512xf32> to vector<8x512xf32>
    %6 = arith.addf %3, %5 : vector<8x512xf32>
    %cst_5 = arith.constant 2.000000e-01 : f32
    %7 = vector.broadcast %cst_5 : f32 to vector<8x512xf32>
    %8 = arith.mulf %7, %6 : vector<8x512xf32>
    %9 = arith.maximumf %6, %8 : vector<8x512xf32>
    %10 = arith.truncf %9 : vector<8x512xf32> to vector<8x512xbf16>
    %c0_6 = arith.constant 0 : index
    %c0_7 = arith.constant 0 : index
    %11 = vector.load %arg4[%c0_6, %c0_7] : memref<512x512xbf16, #tpu.memory_space<vmem>>, vector<512x512xbf16>
    %cst_8 = arith.constant dense<0.000000e+00> : vector<8x512xf32>
    %12 = tpu.matmul %10, %11, %cst_8 {dimension_numbers = #tpu.dot_dimension_numbers<[1], [0], [0], [1], [0, 0, 1, 1], [], []>} : vector<8x512xbf16>, vector<512x512xbf16>, vector<8x512xf32> -> vector<8x512xf32>
    %c0_9 = arith.constant 0 : index
    %c0_10 = arith.constant 0 : index
    %13 = vector.load %arg5[%c0_9, %c0_10] : memref<1x512xf32, #tpu.memory_space<vmem>>, vector<1x512xf32>
    %14 = vector.broadcast %13 : vector<1x512xf32> to vector<8x512xf32>
    %15 = arith.addf %12, %14 : vector<8x512xf32>
    %cst_11 = arith.constant 2.000000e-01 : f32
    %16 = vector.broadcast %cst_11 : f32 to vector<8x512xf32>
    %17 = arith.mulf %16, %15 : vector<8x512xf32>
    %18 = arith.maximumf %15, %17 : vector<8x512xf32>
    %19 = arith.truncf %18 : vector<8x512xf32> to vector<8x512xbf16>
    %c0_12 = arith.constant 0 : index
    %c0_13 = arith.constant 0 : index
    %20 = vector.load %arg6[%c0_12, %c0_13] : memref<512x512xbf16, #tpu.memory_space<vmem>>, vector<512x512xbf16>
    %cst_14 = arith.constant dense<0.000000e+00> : vector<8x512xf32>
    %21 = tpu.matmul %19, %20, %cst_14 {dimension_numbers = #tpu.dot_dimension_numbers<[1], [0], [0], [1], [0, 0, 1, 1], [], []>} : vector<8x512xbf16>, vector<512x512xbf16>, vector<8x512xf32> -> vector<8x512xf32>
    %c0_15 = arith.constant 0 : index
    %c0_16 = arith.constant 0 : index
    %22 = vector.load %arg7[%c0_15, %c0_16] : memref<1x512xf32, #tpu.memory_space<vmem>>, vector<1x512xf32>
    %23 = vector.broadcast %22 : vector<1x512xf32> to vector<8x512xf32>
    %24 = arith.addf %21, %23 : vector<8x512xf32>
    %cst_17 = arith.constant 2.000000e-01 : f32
    %25 = vector.broadcast %cst_17 : f32 to vector<8x512xf32>
    %26 = arith.mulf %25, %24 : vector<8x512xf32>
    %27 = arith.maximumf %24, %26 : vector<8x512xf32>
    %c0_18 = arith.constant 0 : index
    %c0_19 = arith.constant 0 : index
    %28 = vector.load %arg8[%c0_18, %c0_19] : memref<1x512xf32, #tpu.memory_space<vmem>>, vector<1x512xf32>
    %29 = vector.broadcast %28 : vector<1x512xf32> to vector<8x512xf32>
    %30 = arith.mulf %27, %29 : vector<8x512xf32>
    %cst_20 = arith.constant dense<0.000000e+00> : vector<8xf32>
    %31 = vector.multi_reduction <add>, %30, %cst_20 [1] : vector<8x512xf32> to vector<8xf32>
    %32 = vector.shape_cast %31 : vector<8xf32> to vector<8x1xf32>
    %c0_21 = arith.constant 0 : index
    %c0_22 = arith.constant 0 : index
    %33 = vector.load %arg9[%c0_21, %c0_22] : memref<1x1xf32, #tpu.memory_space<vmem>>, vector<1x1xf32>
    %34 = vector.broadcast %33 : vector<1x1xf32> to vector<8x1xf32>
    %35 = arith.addf %32, %34 : vector<8x1xf32>
    %c0_23 = arith.constant 0 : index
    %c0_24 = arith.constant 0 : index
    %36 = vector.load %arg10[%c0_23, %c0_24] : memref<8x1xf32, #tpu.memory_space<vmem>>, vector<8x1xf32>
    tpu.vector_store %arg10[%c0_23, %c0_24], %35 {strides = array<i32>} : memref<8x1xf32, #tpu.memory_space<vmem>>, vector<8x1xf32>,
    return
  }
  func.func @transform_0(%arg0: i32) -> (i32, i32) {
    %c0_i32 = arith.constant 0 : i32
    %c0_i32_0 = arith.constant 0 : i32
    return %arg0, %c0_i32 : i32, i32
  }
  func.func @transform_1(%arg0: i32) -> (i32, i32) {
    %c0_i32 = arith.constant 0 : i32
    %c0_i32_0 = arith.constant 0 : i32
    %c0_i32_1 = arith.constant 0 : i32
    return %c0_i32, %c0_i32_0 : i32, i32
  }
  func.func @transform_2(%arg0: i32) -> (i32, i32) {
    %c0_i32 = arith.constant 0 : i32
    %c0_i32_0 = arith.constant 0 : i32
    %c0_i32_1 = arith.constant 0 : i32
    return %c0_i32, %c0_i32_0 : i32, i32
  }
  func.func @transform_3(%arg0: i32) -> (i32, i32) {
    %c0_i32 = arith.constant 0 : i32
    %c0_i32_0 = arith.constant 0 : i32
    %c0_i32_1 = arith.constant 0 : i32
    return %c0_i32, %c0_i32_0 : i32, i32
  }
  func.func @transform_4(%arg0: i32) -> (i32, i32) {
    %c0_i32 = arith.constant 0 : i32
    %c0_i32_0 = arith.constant 0 : i32
    %c0_i32_1 = arith.constant 0 : i32
    return %c0_i32, %c0_i32_0 : i32, i32
  }
  func.func @transform_5(%arg0: i32) -> (i32, i32) {
    %c0_i32 = arith.constant 0 : i32
    %c0_i32_0 = arith.constant 0 : i32
    %c0_i32_1 = arith.constant 0 : i32
    return %c0_i32, %c0_i32_0 : i32, i32
  }
  func.func @transform_6(%arg0: i32) -> (i32, i32) {
    %c0_i32 = arith.constant 0 : i32
    %c0_i32_0 = arith.constant 0 : i32
    %c0_i32_1 = arith.constant 0 : i32
    return %c0_i32, %c0_i32_0 : i32, i32
  }
  func.func @transform_7(%arg0: i32) -> (i32, i32) {
    %c0_i32 = arith.constant 0 : i32
    %c0_i32_0 = arith.constant 0 : i32
    %c0_i32_1 = arith.constant 0 : i32
    return %c0_i32, %c0_i32_0 : i32, i32
  }
  func.func @transform_8(%arg0: i32) -> (i32, i32) {
    %c0_i32 = arith.constant 0 : i32
    %c0_i32_0 = arith.constant 0 : i32
    %c0_i32_1 = arith.constant 0 : i32
    return %c0_i32, %c0_i32_0 : i32, i32
  }
  func.func @transform_9(%arg0: i32) -> (i32, i32) {
    %c0_i32 = arith.constant 0 : i32
    %c0_i32_0 = arith.constant 0 : i32
    return %arg0, %c0_i32 : i32, i32
  }
}

</mosaic_0001>

<llo_original>
// kernel: tpu_custom_call.1
$region0: #{tpu_custom_call.1}
  #allocation0 [shape = 'u32[]', space=smem, size = 0x4, offset = 0x4, fixed_abs, tag = 'smem constant byte address 0x4 - core index']
  #allocation1 [shape = 'u32[144,128]{1,0:T(1,128)}', space=vmem, size = 0x12000, scoped, tag = 'internal scratch']
  #allocation2 [shape = 'f32[1,1]{1,0:T(1,128)S(1)}', space=vmem, size = 0x200, scoped, tag = 'scoped memory for tpu_custom_call.1']
  %s0 = inlined_call_operand.hbm [shape: f32[8,32], index: 0, kind: input, shape index: {}]
  %s1 = inlined_call_operand.hbm [shape: bf16[32,512], index: 1, kind: input, shape index: {}]
  %s2 = inlined_call_operand.vmem [shape: f32[1,512], index: 2, kind: input, shape index: {}]
  %s3 = inlined_call_operand.hbm [shape: bf16[512,512], index: 3, kind: input, shape index: {}]
  %s4 = inlined_call_operand.vmem [shape: f32[1,512], index: 4, kind: input, shape index: {}]
  %s5 = inlined_call_operand.hbm [shape: bf16[512,512], index: 5, kind: input, shape index: {}]
  %s6 = inlined_call_operand.vmem [shape: f32[1,512], index: 6, kind: input, shape index: {}]
  %s7 = inlined_call_operand.vmem [shape: f32[1,512], index: 7, kind: input, shape index: {}]
  %s8 = inlined_call_operand.<no memory space> [shape: f32[1,1], index: 8, kind: input, shape index: {}]
  %s9 = inlined_call_operand.vmem [shape: f32[8,1], index: 9, kind: output, shape index: {}]
  %s10 = sld [smem:[#allocation0]]
  $region62: #{tpu_custom_call.1} parent=0
    _
  %s12 = ssub.s32 1, %s10
  %s13 = scalar_select 0, %s12, %s10
  %v14 = vstv %s8
  %15 = vst [vmem:[#allocation2] sm:$0x1] %v14
  $region1: #{tpu_custom_call.1} parent=0
    #allocation3 [shape = 'u8[4096]{0}', space=vmem, size = 0x1000, scoped, tag = 'input window, operand 0, single buffered']
    #allocation4 [shape = 's32[1]{0}', space=sflag, size = 0x4, scoped, tag = 'scoped memory for tpu_custom_call.1']
    #allocation5 [shape = 'u8[32768]{0}', space=vmem, size = 0x8000, scoped, tag = 'input window, operand 1, single buffered']
    #allocation6 [shape = 's32[1]{0}', space=sflag, size = 0x4, scoped, tag = 'scoped memory for tpu_custom_call.1']
    #allocation7 [shape = 'u8[524288]{0}', space=vmem, size = 0x80000, scoped, tag = 'input window, operand 3, single buffered']
    #allocation8 [shape = 'u8[524288]{0}', space=vmem, size = 0x80000, scoped, tag = 'input window, operand 5, single buffered']
    #allocation9 [shape = 's32[1]{0}', space=sflag, size = 0x4, scoped, tag = 'scoped memory for tpu_custom_call.1']
    %16 = vsyncpa [#allocation4], 0
    %17 = vsyncpa [#allocation6], 0
    %18 = vsyncpa [#allocation9], 0
    // Predicated region
    $region2: #{tpu_custom_call.1} parent=1 // pred_check
      _
    $region3: #{tpu_custom_call.1} parent=1 // pred_check_branch
      %20 = sbr.rel (0) target = $region5
    $region4: #{tpu_custom_call.1} parent=1 // pred_region
      %s22 = ssub.s32 128, 128
      %23 = vsyncadd [#allocation4], %s22
      %s25 = sshll.u32 [#allocation3], 4
      %s26 = int_to_ptr.vmem [resolvable:$true] %s25
      %28 = dma.hbm_to_vmem [thread:$0]  %s0, 128, %s26, [#allocation4]
    $region5: #{tpu_custom_call.1} parent=1 // pred_fallthru
      _
    // Predicated region
    $region6: #{tpu_custom_call.1} parent=1 // pred_check
      _
    $region7: #{tpu_custom_call.1} parent=1 // pred_check_branch
      %30 = sbr.rel (0) target = $region9
    $region8: #{tpu_custom_call.1} parent=1 // pred_region
      %s32 = ssub.s32 1024, 1024
      %33 = vsyncadd [#allocation6], %s32
      %s34 = sshll.u32 [#allocation5], 4
      %s35 = int_to_ptr.vmem [resolvable:$true] %s34
      %40 = dma.hbm_to_vmem [thread:$0]  %s1, 1024, %s35, [#allocation6], 256, 256, 16
    $region9: #{tpu_custom_call.1} parent=1 // pred_fallthru
      _
    // Predicated region
    $region10: #{tpu_custom_call.1} parent=1 // pred_check
      _
    $region11: #{tpu_custom_call.1} parent=1 // pred_check_branch
      %42 = sbr.rel (0) target = $region13
    $region12: #{tpu_custom_call.1} parent=1 // pred_region
      _
    $region13: #{tpu_custom_call.1} parent=1 // pred_fallthru
      _
    // Predicated region
    $region14: #{tpu_custom_call.1} parent=1 // pred_check
      _
    $region15: #{tpu_custom_call.1} parent=1 // pred_check_branch
      %44 = sbr.rel (0) target = $region17
    $region16: #{tpu_custom_call.1} parent=1 // pred_region
      %s46 = ssub.s32 16384, 16384
      %47 = vsyncadd [#allocation6], %s46
      %s48 = sshll.u32 [#allocation7], 4
      %s49 = int_to_ptr.vmem [resolvable:$true] %s48
      %54 = dma.hbm_to_vmem [thread:$0]  %s3, 16384, %s49, [#allocation6], 256, 256, 16
    $region17: #{tpu_custom_call.1} parent=1 // pred_fallthru
      _
    // Predicated region
    $region18: #{tpu_custom_call.1} parent=1 // pred_check
      _
    $region19: #{tpu_custom_call.1} parent=1 // pred_check_branch
      %56 = sbr.rel (0) target = $region21
    $region20: #{tpu_custom_call.1} parent=1 // pred_region
      _
    $region21: #{tpu_custom_call.1} parent=1 // pred_fallthru
      _
    // Predicated region
    $region22: #{tpu_custom_call.1} parent=1 // pred_check
      _
    $region23: #{tpu_custom_call.1} parent=1 // pred_check_branch
      %58 = sbr.rel (0) target = $region25
    $region24: #{tpu_custom_call.1} parent=1 // pred_region
      %s60 = ssub.s32 16384, 16384
      %61 = vsyncadd [#allocation9], %s60
      %s62 = sshll.u32 [#allocation8], 4
      %s63 = int_to_ptr.vmem [resolvable:$true] %s62
      %68 = dma.hbm_to_vmem [thread:$0]  %s5, 16384, %s63, [#allocation9], 256, 256, 16
    $region25: #{tpu_custom_call.1} parent=1 // pred_fallthru
      _
    // Predicated region
    $region26: #{tpu_custom_call.1} parent=1 // pred_check
      _
    $region27: #{tpu_custom_call.1} parent=1 // pred_check_branch
      %70 = sbr.rel (0) target = $region29
    $region28: #{tpu_custom_call.1} parent=1 // pred_region
      _
    $region29: #{tpu_custom_call.1} parent=1 // pred_fallthru
      _
    // Predicated region
    $region30: #{tpu_custom_call.1} parent=1 // pred_check
      _
    $region31: #{tpu_custom_call.1} parent=1 // pred_check_branch
      %72 = sbr.rel (0) target = $region33
    $region32: #{tpu_custom_call.1} parent=1 // pred_region
      _
    $region33: #{tpu_custom_call.1} parent=1 // pred_fallthru
      _
    // Predicated region
    $region34: #{tpu_custom_call.1} parent=1 // pred_check
      _
    $region35: #{tpu_custom_call.1} parent=1 // pred_check_branch
      %74 = sbr.rel (0) target = $region37
    $region36: #{tpu_custom_call.1} parent=1 // pred_region
      _
    $region37: #{tpu_custom_call.1} parent=1 // pred_fallthru
      _
    // Predicated region
    $region38: #{tpu_custom_call.1} parent=1 // pred_check
      _
    $region39: #{tpu_custom_call.1} parent=1 // pred_check_branch
      %76 = sbr.rel (0) target = $region41
    $region40: #{tpu_custom_call.1} parent=1 // pred_region
      %77 = dma.done [#allocation4], 128
    $region41: #{tpu_custom_call.1} parent=1 // pred_fallthru
      _
    // Predicated region
    $region42: #{tpu_custom_call.1} parent=1 // pred_check
      _
    $region43: #{tpu_custom_call.1} parent=1 // pred_check_branch
      %79 = sbr.rel (0) target = $region45
    $region44: #{tpu_custom_call.1} parent=1 // pred_region
      %80 = dma.done [#allocation6], 1024
    $region45: #{tpu_custom_call.1} parent=1 // pred_fallthru
      _
    // Predicated region
    $region46: #{tpu_custom_call.1} parent=1 // pred_check
      _
    $region47: #{tpu_custom_call.1} parent=1 // pred_check_branch
      %82 = sbr.rel (0) target = $region49
    $region48: #{tpu_custom_call.1} parent=1 // pred_region
      %83 = dma.done [#allocation6], 16384
    $region49: #{tpu_custom_call.1} parent=1 // pred_fallthru
      _
    // Predicated region
    $region50: #{tpu_custom_call.1} parent=1 // pred_check
      _
    $region51: #{tpu_custom_call.1} parent=1 // pred_check_branch
      %85 = sbr.rel (0) target = $region53
    $region52: #{tpu_custom_call.1} parent=1 // pred_region
      %86 = dma.done [#allocation9], 16384
    $region53: #{tpu_custom_call.1} parent=1 // pred_fallthru
      _
    %v88 = vld [vmem:[#allocation3] sm:$0xff]
    %v89 = vpack.c.bf16 %v88, %v88
    %v90 = vld [vmem:[#allocation5] sm:$0xff]
    %v91 = vld [vmem:[#allocation5 + $0x8] sm:$0xff]
    %v92 = vld [vmem:[#allocation5 + $0x10] sm:$0xff]
    %v93 = vld [vmem:[#allocation5 + $0x18] sm:$0xff]
    %v94 = vld [vmem:[#allocation5 + $0x20] sm:$0xff]
    %v95 = vld [vmem:[#allocation5 + $0x28] sm:$0xff]
    %v96 = vld [vmem:[#allocation5 + $0x30] sm:$0xff]
    %v97 = vld [vmem:[#allocation5 + $0x38] sm:$0xff]
    %v98 = vld [vmem:[%s2] sm:$0xf]
    %v100 = vlaneseq
    %v101 = vshrl.u32 %v100, 7
    %v102 = vsub.s32 0, %v101
    %v103 = vrot.slane %v98, %v102
    %v104 = vlaneseq
    %v105 = vshrl.u32 %v104, 7
    %v106 = vsub.s32 1, %v105
    %v107 = vrot.slane %v98, %v106
    %v108 = vlaneseq
    %v109 = vshrl.u32 %v108, 7
    %v110 = vsub.s32 2, %v109
    %v111 = vrot.slane %v98, %v110
    %v112 = vlaneseq
    %v113 = vshrl.u32 %v112, 7
    %v114 = vsub.s32 3, %v113
    %v115 = vrot.slane %v98, %v114
    %v128 = vunpack.c.l.b16 %v90
    %v129 = vunpack.c.h.b16 %v90
    %v130 = vunpack.c.l.b16 %v91
    %v131 = vunpack.c.h.b16 %v91
    %v132 = vunpack.c.l.b16 %v92
    %v133 = vunpack.c.h.b16 %v92
    %v134 = vunpack.c.l.b16 %v93
    %v135 = vunpack.c.h.b16 %v93
    %v136 = vunpack.c.l.b16 %v94
    %v137 = vunpack.c.h.b16 %v94
    %v138 = vunpack.c.l.b16 %v95
    %v139 = vunpack.c.h.b16 %v95
    %v140 = vunpack.c.l.b16 %v96
    %v141 = vunpack.c.h.b16 %v96
    %v142 = vunpack.c.l.b16 %v97
    %v143 = vunpack.c.h.b16 %v97
    %v144 = vpack.c.b16 %v132, %v128
    %v145 = vpack.c.b16 %v133, %v129
    %v146 = vpack.c.b16 %v134, %v130
    %v147 = vpack.c.b16 %v135, %v131
    %v148 = vpack.c.b16 %v140, %v136
    %v149 = vpack.c.b16 %v141, %v137
    %v150 = vpack.c.b16 %v142, %v138
    %v151 = vpack.c.b16 %v143, %v139
    %vm160 = vcmask 261120
    %v162 = vsel %vm160, %v89, 0
    %164 = vmatprep.subr.bf16.mxu0 %v145
    %165 = vmatpush1.bf16.msra.mxu0 %v144
    %166 = vmatprep.subr.bf16.mxu0 %v149
    %167 = vmatpush1.bf16.msra.mxu0 %v148
    %168 = vmatprep.subr.bf16.mxu0 0
    %169 = vmatpush1.bf16.msra.mxu0 0
    %170 = vmatprep.subr.bf16.mxu0 0
    %171 = vmatpush1.bf16.msra.mxu0 0
    %172 = vmatprep.subr.bf16.mxu0 0
    %173 = vmatpush1.bf16.msra.mxu0 0
    %174 = vmatprep.subr.bf16.mxu0 0
    %175 = vmatpush1.bf16.msra.mxu0 0
    %176 = vmatprep.subr.bf16.mxu0 0
    %177 = vmatpush1.bf16.msra.mxu0 0
    %178 = vmatprep.subr.bf16.mxu0 0
    %179 = vmatpush1.bf16.msra.mxu0 0
    %180 = vmatprep.subr.bf16.mxu0 0
    %181 = vmatpush1.bf16.msra.mxu0 0
    %182 = vmatprep.subr.bf16.mxu0 0
    %183 = vmatpush1.bf16.msra.mxu0 0
    %184 = vmatprep.subr.bf16.mxu0 0
    %185 = vmatpush1.bf16.msra.mxu0 0
    %186 = vmatprep.subr.bf16.mxu0 0
    %187 = vmatpush1.bf16.msra.mxu0 0
    %188 = vmatprep.subr.bf16.mxu0 0
    %189 = vmatpush1.bf16.msra.mxu0 0
    %190 = vmatprep.subr.bf16.mxu0 0
    %191 = vmatpush1.bf16.msra.mxu0 0
    %192 = vmatprep.subr.bf16.mxu0 0
    %193 = vmatpush1.bf16.msra.mxu0 0
    %194 = vmatprep.subr.bf16.mxu0 0
    %195 = vmatpush1.bf16.msra.mxu0 0
    %196 = vmatprep.mubr.bf16.mxu0 0
    %197 = vmatmul.mubr.bf16.gmra.mrb[0].mxu0 %v162
    %v198 = vpop.f32.mrb[0].mxu0
    %v199 = vadd.f32 %v103, %v198
    %v200 = vpop.f32.mrb[0].mxu0
    %v201 = vadd.f32 %v107, %v200
    %v202 = vpop.f32.mrb[0].mxu0
    %v203 = vpop.f32.mrb[0].mxu0
    %204 = vdwg.mxu0
    %205 = vmatprep.subr.bf16.mxu0 %v147
    %206 = vmatpush1.bf16.msra.mxu0 %v146
    %207 = vmatprep.subr.bf16.mxu0 %v151
    %208 = vmatpush1.bf16.msra.mxu0 %v150
    %209 = vmatprep.subr.bf16.mxu0 0
    %210 = vmatpush1.bf16.msra.mxu0 0
    %211 = vmatprep.subr.bf16.mxu0 0
    %212 = vmatpush1.bf16.msra.mxu0 0
    %213 = vmatprep.subr.bf16.mxu0 0
    %214 = vmatpush1.bf16.msra.mxu0 0
    %215 = vmatprep.subr.bf16.mxu0 0
    %216 = vmatpush1.bf16.msra.mxu0 0
    %217 = vmatprep.subr.bf16.mxu0 0
    %218 = vmatpush1.bf16.msra.mxu0 0
    %219 = vmatprep.subr.bf16.mxu0 0
    %220 = vmatpush1.bf16.msra.mxu0 0
    %221 = vmatprep.subr.bf16.mxu0 0
    %222 = vmatpush1.bf16.msra.mxu0 0
    %223 = vmatprep.subr.bf16.mxu0 0
    %224 = vmatpush1.bf16.msra.mxu0 0
    %225 = vmatprep.subr.bf16.mxu0 0
    %226 = vmatpush1.bf16.msra.mxu0 0
    %227 = vmatprep.subr.bf16.mxu0 0
    %228 = vmatpush1.bf16.msra.mxu0 0
    %229 = vmatprep.subr.bf16.mxu0 0
    %230 = vmatpush1.bf16.msra.mxu0 0
    %231 = vmatprep.subr.bf16.mxu0 0
    %232 = vmatpush1.bf16.msra.mxu0 0
    %233 = vmatprep.subr.bf16.mxu0 0
    %234 = vmatpush1.bf16.msra.mxu0 0
    %235 = vmatprep.subr.bf16.mxu0 0
    %236 = vmatpush1.bf16.msra.mxu0 0
    %237 = vmatprep.mubr.bf16.mxu0 0
    %238 = vmatmul.mubr.bf16.gmra.mrb[0].mxu0 %v162
    %v239 = vpop.f32.mrb[0].mxu0
    %v240 = vadd.f32 %v111, %v239
    %v241 = vpop.f32.mrb[0].mxu0
    %v242 = vadd.f32 %v115, %v241
    %v243 = vpop.f32.mrb[0].mxu0
    %v244 = vpop.f32.mrb[0].mxu0
    %245 = vdwg.mxu0
    %v246 = vmul.f32 %v199, 0.2
    %v247 = vmul.f32 %v201, 0.2
    %v248 = vmul.f32 %v240, 0.2
    %v249 = vmul.f32 %v242, 0.2
    %v250 = vmax.f32 %v199, %v246
    %v251 = vmax.f32 %v201, %v247
    %v252 = vmax.f32 %v240, %v248
    %v253 = vmax.f32 %v242, %v249
    %v254 = vpack.c.bf16 %v250, %v250
    %v255 = vpack.c.bf16 %v251, %v251
    %v256 = vpack.c.bf16 %v252, %v252
    %v257 = vpack.c.bf16 %v253, %v253
    %v258 = vld [vmem:[#allocation7] sm:$0xff]
    %v259 = vld [vmem:[#allocation7 + $0x8] sm:$0xff]
    %v260 = vld [vmem:[#allocation7 + $0x10] sm:$0xff]
    %v261 = vld [vmem:[#allocation7 + $0x18] sm:$0xff]
    %v262 = vld [vmem:[#allocation7 + $0x20] sm:$0xff]
    %v263 = vld [vmem:[#allocation7 + $0x28] sm:$0xff]
    %v264 = vld [vmem:[#allocation7 + $0x30] sm:$0xff]
    %v265 = vld [vmem:[#allocation7 + $0x38] sm:$0xff]
    %v266 = vld [vmem:[#allocation7 + $0x40] sm:$0xff]
    %v267 = vld [vmem:[#allocation7 + $0x48] sm:$0xff]
    %v268 = vld [vmem:[#allocation7 + $0x50] sm:$0xff]
    %v269 = vld [vmem:[#allocation7 + $0x58] sm:$0xff]
    %v270 = vld [vmem:[#allocation7 + $0x60] sm:$0xff]
    %v271 = vld [vmem:[#allocation7 + $0x68] sm:$0xff]
    %v272 = vld [vmem:[#allocation7 + $0x70] sm:$0xff]
    %v273 = vld [vmem:[#allocation7 + $0x78] sm:$0xff]
    %v274 = vld [vmem:[#allocation7 + $0x80] sm:$0xff]
    %v275 = vld [vmem:[#allocation7 + $0x88] sm:$0xff]
    %v276 = vld [vmem:[#allocation7 + $0x90] sm:$0xff]
    %v277 = vld [vmem:[#allocation7 + $0x98] sm:$0xff]
    %v278 = vld [vmem:[#allocation7 + $0xa0] sm:$0xff]
    %v279 = vld [vmem:[#allocation7 + $0xa8] sm:$0xff]
    %v280 = vld [vmem:[#allocation7 + $0xb0] sm:$0xff]
    %v281 = vld [vmem:[#allocation7 + $0xb8] sm:$0xff]
    %v282 = vld [vmem:[#allocation7 + $0xc0] sm:$0xff]
    %v283 = vld [vmem:[#allocation7 + $0xc8] sm:$0xff]
    %v284 = vld [vmem:[#allocation7 + $0xd0] sm:$0xff]
    %v285 = vld [vmem:[#allocation7 + $0xd8] sm:$0xff]
    %v286 = vld [vmem:[#allocation7 + $0xe0] sm:$0xff]
    %v287 = vld [vmem:[#allocation7 + $0xe8] sm:$0xff]
    %v288 = vld [vmem:[#allocation7 + $0xf0] sm:$0xff]
    %v289 = vld [vmem:[#allocation7 + $0xf8] sm:$0xff]
    %v290 = vld [vmem:[#allocation7 + $0x100] sm:$0xff]
    %v291 = vld [vmem:[#allocation7 + $0x108] sm:$0xff]
    %v292 = vld [vmem:[#allocation7 + $0x110] sm:$0xff]
    %v293 = vld [vmem:[#allocation7 + $0x118] sm:$0xff]
    %v294 = vld [vmem:[#allocation7 + $0x120] sm:$0xff]
    %v295 = vld [vmem:[#allocation7 + $0x128] sm:$0xff]
    %v296 = vld [vmem:[#allocation7 + $0x130] sm:$0xff]
    %v297 = vld [vmem:[#allocation7 + $0x138] sm:$0xff]
    %v298 = vld [vmem:[#allocation7 + $0x140] sm:$0xff]
    %v299 = vld [vmem:[#allocation7 + $0x148] sm:$0xff]
    %v300 = vld [vmem:[#allocation7 + $0x150] sm:$0xff]
    %v301 = vld [vmem:[#allocation7 + $0x158] sm:$0xff]
    %v302 = vld [vmem:[#allocation7 + $0x160] sm:$0xff]
    %v303 = vld [vmem:[#allocation7 + $0x168] sm:$0xff]
    %v304 = vld [vmem:[#allocation7 + $0x170] sm:$0xff]
    %v305 = vld [vmem:[#allocation7 + $0x178] sm:$0xff]
    %v306 = vld [vmem:[#allocation7 + $0x180] sm:$0xff]
    %v307 = vld [vmem:[#allocation7 + $0x188] sm:$0xff]
    %v308 = vld [vmem:[#allocation7 + $0x190] sm:$0xff]
    %v309 = vld [vmem:[#allocation7 + $0x198] sm:$0xff]
    %v310 = vld [vmem:[#allocation7 + $0x1a0] sm:$0xff]
    %v311 = vld [vmem:[#allocation7 + $0x1a8] sm:$0xff]
    %v312 = vld [vmem:[#allocation7 + $0x1b0] sm:$0xff]
    %v313 = vld [vmem:[#allocation7 + $0x1b8] sm:$0xff]
    %v314 = vld [vmem:[#allocation7 + $0x1c0] sm:$0xff]
    %v315 = vld [vmem:[#allocation7 + $0x1c8] sm:$0xff]
    %v316 = vld [vmem:[#allocation7 + $0x1d0] sm:$0xff]
    %v317 = vld [vmem:[#allocation7 + $0x1d8] sm:$0xff]
    %v318 = vld [vmem:[#allocation7 + $0x1e0] sm:$0xff]
    %v319 = vld [vmem:[#allocation7 + $0x1e8] sm:$0xff]
    %v320 = vld [vmem:[#allocation7 + $0x1f0] sm:$0xff]
    %v321 = vld [vmem:[#allocation7 + $0x1f8] sm:$0xff]
    %v322 = vld [vmem:[#allocation7 + $0x200] sm:$0xff]
    %v323 = vld [vmem:[#allocation7 + $0x208] sm:$0xff]
    %v324 = vld [vmem:[#allocation7 + $0x210] sm:$0xff]
    %v325 = vld [vmem:[#allocation7 + $0x218] sm:$0xff]
    %v326 = vld [vmem:[#allocation7 + $0x220] sm:$0xff]
    %v327 = vld [vmem:[#allocation7 + $0x228] sm:$0xff]
    %v328 = vld [vmem:[#allocation7 + $0x230] sm:$0xff]
    %v329 = vld [vmem:[#allocation7 + $0x238] sm:$0xff]
    %v330 = vld [vmem:[#allocation7 + $0x240] sm:$0xff]
    %v331 = vld [vmem:[#allocation7 + $0x248] sm:$0xff]
    %v332 = vld [vmem:[#allocation7 + $0x250] sm:$0xff]
    %v333 = vld [vmem:[#allocation7 + $0x258] sm:$0xff]
    %v334 = vld [vmem:[#allocation7 + $0x260] sm:$0xff]
    %v335 = vld [vmem:[#allocation7 + $0x268] sm:$0xff]
    %v336 = vld [vmem:[#allocation7 + $0x270] sm:$0xff]
    %v337 = vld [vmem:[#allocation7 + $0x278] sm:$0xff]
    %v338 = vld [vmem:[#allocation7 + $0x280] sm:$0xff]
    %v339 = vld [vmem:[#allocation7 + $0x288] sm:$0xff]
    %v340 = vld [vmem:[#allocation7 + $0x290] sm:$0xff]
    %v341 = vld [vmem:[#allocation7 + $0x298] sm:$0xff]
    %v342 = vld [vmem:[#allocation7 + $0x2a0] sm:$0xff]
    %v343 = vld [vmem:[#allocation7 + $0x2a8] sm:$0xff]
    %v344 = vld [vmem:[#allocation7 + $0x2b0] sm:$0xff]
    %v345 = vld [vmem:[#allocation7 + $0x2b8] sm:$0xff]
    %v346 = vld [vmem:[#allocation7 + $0x2c0] sm:$0xff]
    %v347 = vld [vmem:[#allocation7 + $0x2c8] sm:$0xff]
    %v348 = vld [vmem:[#allocation7 + $0x2d0] sm:$0xff]
    %v349 = vld [vmem:[#allocation7 + $0x2d8] sm:$0xff]
    %v350 = vld [vmem:[#allocation7 + $0x2e0] sm:$0xff]
    %v351 = vld [vmem:[#allocation7 + $0x2e8] sm:$0xff]
    %v352 = vld [vmem:[#allocation7 + $0x2f0] sm:$0xff]
    %v353 = vld [vmem:[#allocation7 + $0x2f8] sm:$0xff]
    %v354 = vld [vmem:[#allocation7 + $0x300] sm:$0xff]
    %v355 = vld [vmem:[#allocation7 + $0x308] sm:$0xff]
    %v356 = vld [vmem:[#allocation7 + $0x310] sm:$0xff]
    %v357 = vld [vmem:[#allocation7 + $0x318] sm:$0xff]
    %v358 = vld [vmem:[#allocation7 + $0x320] sm:$0xff]
    %v359 = vld [vmem:[#allocation7 + $0x328] sm:$0xff]
    %v360 = vld [vmem:[#allocation7 + $0x330] sm:$0xff]
    %v361 = vld [vmem:[#allocation7 + $0x338] sm:$0xff]
    %v362 = vld [vmem:[#allocation7 + $0x340] sm:$0xff]
    %v363 = vld [vmem:[#allocation7 + $0x348] sm:$0xff]
    %v364 = vld [vmem:[#allocation7 + $0x350] sm:$0xff]
    %v365 = vld [vmem:[#allocation7 + $0x358] sm:$0xff]
    %v366 = vld [vmem:[#allocation7 + $0x360] sm:$0xff]
    %v367 = vld [vmem:[#allocation7 + $0x368] sm:$0xff]
    %v368 = vld [vmem:[#allocation7 + $0x370] sm:$0xff]
    %v369 = vld [vmem:[#allocation7 + $0x378] sm:$0xff]
    %v370 = vld [vmem:[#allocation7 + $0x380] sm:$0xff]
    %v371 = vld [vmem:[#allocation7 + $0x388] sm:$0xff]
    %v372 = vld [vmem:[#allocation7 + $0x390] sm:$0xff]
    %v373 = vld [vmem:[#allocation7 + $0x398] sm:$0xff]
    %v374 = vld [vmem:[#allocation7 + $0x3a0] sm:$0xff]
    %v375 = vld [vmem:[#allocation7 + $0x3a8] sm:$0xff]
    %v376 = vld [vmem:[#allocation7 + $0x3b0] sm:$0xff]
    %v377 = vld [vmem:[#allocation7 + $0x3b8] sm:$0xff]
    %v378 = vld [vmem:[#allocation7 + $0x3c0] sm:$0xff]
    %v379 = vld [vmem:[#allocation7 + $0x3c8] sm:$0xff]
    %v380 = vld [vmem:[#allocation7 + $0x3d0] sm:$0xff]
    %v381 = vld [vmem:[#allocation7 + $0x3d8] sm:$0xff]
    %v382 = vld [vmem:[#allocation7 + $0x3e0] sm:$0xff]
    %v383 = vld [vmem:[#allocation7 + $0x3e8] sm:$0xff]
    %v384 = vld [vmem:[#allocation7 + $0x3f0] sm:$0xff]
    %v385 = vld [vmem:[#allocation7 + $0x3f8] sm:$0xff]
    %v386 = vld [vmem:[%s4] sm:$0xf]
    %v388 = vlaneseq
    %v389 = vshrl.u32 %v388, 7
    %v390 = vsub.s32 0, %v389
    %v391 = vrot.slane %v386, %v390
    %v392 = vlaneseq
    %v393 = vshrl.u32 %v392, 7
    %v394 = vsub.s32 1, %v393
    %v395 = vrot.slane %v386, %v394
    %v396 = vlaneseq
    %v397 = vshrl.u32 %v396, 7
    %v398 = vsub.s32 2, %v397
    %v399 = vrot.slane %v386, %v398
    %v400 = vlaneseq
    %v401 = vshrl.u32 %v400, 7
    %v402 = vsub.s32 3, %v401
    %v403 = vrot.slane %v386, %v402
    %v536 = vunpack.c.l.b16 %v258
    %v537 = vunpack.c.h.b16 %v258
    %v538 = vunpack.c.l.b16 %v259
    %v539 = vunpack.c.h.b16 %v259
    %v540 = vunpack.c.l.b16 %v260
    %v541 = vunpack.c.h.b16 %v260
    %v542 = vunpack.c.l.b16 %v261
    %v543 = vunpack.c.h.b16 %v261
    %v544 = vunpack.c.l.b16 %v262
    %v545 = vunpack.c.h.b16 %v262
    %v546 = vunpack.c.l.b16 %v263
    %v547 = vunpack.c.h.b16 %v263
    %v548 = vunpack.c.l.b16 %v264
    %v549 = vunpack.c.h.b16 %v264
    %v550 = vunpack.c.l.b16 %v265
    %v551 = vunpack.c.h.b16 %v265
    %v552 = vunpack.c.l.b16 %v266
    %v553 = vunpack.c.h.b16 %v266
    %v554 = vunpack.c.l.b16 %v267
    %v555 = vunpack.c.h.b16 %v267
    %v556 = vunpack.c.l.b16 %v268
    %v557 = vunpack.c.h.b16 %v268
    %v558 = vunpack.c.l.b16 %v269
    %v559 = vunpack.c.h.b16 %v269
    %v560 = vunpack.c.l.b16 %v270
    %v561 = vunpack.c.h.b16 %v270
    %v562 = vunpack.c.l.b16 %v271
    %v563 = vunpack.c.h.b16 %v271
    %v564 = vunpack.c.l.b16 %v272
    %v565 = vunpack.c.h.b16 %v272
    %v566 = vunpack.c.l.b16 %v273
    %v567 = vunpack.c.h.b16 %v273
    %v568 = vunpack.c.l.b16 %v274
    %v569 = vunpack.c.h.b16 %v274
    %v570 = vunpack.c.l.b16 %v275
    %v571 = vunpack.c.h.b16 %v275
    %v572 = vunpack.c.l.b16 %v276
    %v573 = vunpack.c.h.b16 %v276
    %v574 = vunpack.c.l.b16 %v277
    %v575 = vunpack.c.h.b16 %v277
    %v576 = vunpack.c.l.b16 %v278
    %v577 = vunpack.c.h.b16 %v278
    %v578 = vunpack.c.l.b16 %v279
    %v579 = vunpack.c.h.b16 %v279
    %v580 = vunpack.c.l.b16 %v280
    %v581 = vunpack.c.h.b16 %v280
    %v582 = vunpack.c.l.b16 %v281
    %v583 = vunpack.c.h.b16 %v281
    %v584 = vunpack.c.l.b16 %v282
    %v585 = vunpack.c.h.b16 %v282
    %v586 = vunpack.c.l.b16 %v283
    %v587 = vunpack.c.h.b16 %v283
    %v588 = vunpack.c.l.b16 %v284
    %v589 = vunpack.c.h.b16 %v284
    %v590 = vunpack.c.l.b16 %v285
    %v591 = vunpack.c.h.b16 %v285
    %v592 = vunpack.c.l.b16 %v286
    %v593 = vunpack.c.h.b16 %v286
    %v594 = vunpack.c.l.b16 %v287
    %v595 = vunpack.c.h.b16 %v287
    %v596 = vunpack.c.l.b16 %v288
    %v597 = vunpack.c.h.b16 %v288
    %v598 = vunpack.c.l.b16 %v289
    %v599 = vunpack.c.h.b16 %v289
    %v600 = vunpack.c.l.b16 %v290
    %v601 = vunpack.c.h.b16 %v290
    %v602 = vunpack.c.l.b16 %v291
    %v603 = vunpack.c.h.b16 %v291
    %v604 = vunpack.c.l.b16 %v292
    %v605 = vunpack.c.h.b16 %v292
    %v606 = vunpack.c.l.b16 %v293
    %v607 = vunpack.c.h.b16 %v293
    %v608 = vunpack.c.l.b16 %v294
    %v609 = vunpack.c.h.b16 %v294
    %v610 = vunpack.c.l.b16 %v295
    %v611 = vunpack.c.h.b16 %v295
    %v612 = vunpack.c.l.b16 %v296
    %v613 = vunpack.c.h.b16 %v296
    %v614 = vunpack.c.l.b16 %v297
    %v615 = vunpack.c.h.b16 %v297
    %v616 = vunpack.c.l.b16 %v298
    %v617 = vunpack.c.h.b16 %v298
    %v618 = vunpack.c.l.b16 %v299
    %v619 = vunpack.c.h.b16 %v299
    %v620 = vunpack.c.l.b16 %v300
    %v621 = vunpack.c.h.b16 %v300
    %v622 = vunpack.c.l.b16 %v301
    %v623 = vunpack.c.h.b16 %v301
    %v624 = vunpack.c.l.b16 %v302
    %v625 = vunpack.c.h.b16 %v302
    %v626 = vunpack.c.l.b16 %v303
    %v627 = vunpack.c.h.b16 %v303
    %v628 = vunpack.c.l.b16 %v304
    %v629 = vunpack.c.h.b16 %v304
    %v630 = vunpack.c.l.b16 %v305
    %v631 = vunpack.c.h.b16 %v305
    %v632 = vunpack.c.l.b16 %v306
    %v633 = vunpack.c.h.b16 %v306
    %v634 = vunpack.c.l.b16 %v307
    %v635 = vunpack.c.h.b16 %v307
    %v636 = vunpack.c.l.b16 %v308
    %v637 = vunpack.c.h.b16 %v308
    %v638 = vunpack.c.l.b16 %v309
    %v639 = vunpack.c.h.b16 %v309
    %v640 = vunpack.c.l.b16 %v310
    %v641 = vunpack.c.h.b16 %v310
    %v642 = vunpack.c.l.b16 %v311
    %v643 = vunpack.c.h.b16 %v311
    %v644 = vunpack.c.l.b16 %v312
    %v645 = vunpack.c.h.b16 %v312
    %v646 = vunpack.c.l.b16 %v313
    %v647 = vunpack.c.h.b16 %v313
    %v648 = vunpack.c.l.b16 %v314
    %v649 = vunpack.c.h.b16 %v314
    %v650 = vunpack.c.l.b16 %v315
    %v651 = vunpack.c.h.b16 %v315
    %v652 = vunpack.c.l.b16 %v316
    %v653 = vunpack.c.h.b16 %v316
    %v654 = vunpack.c.l.b16 %v317
    %v655 = vunpack.c.h.b16 %v317
    %v656 = vunpack.c.l.b16 %v318
    %v657 = vunpack.c.h.b16 %v318
    %v658 = vunpack.c.l.b16 %v319
    %v659 = vunpack.c.h.b16 %v319
    %v660 = vunpack.c.l.b16 %v320
    %v661 = vunpack.c.h.b16 %v320
    %v662 = vunpack.c.l.b16 %v321
    %v663 = vunpack.c.h.b16 %v321
    %v664 = vunpack.c.l.b16 %v322
    %v665 = vunpack.c.h.b16 %v322
    %v666 = vunpack.c.l.b16 %v323
    %v667 = vunpack.c.h.b16 %v323
    %v668 = vunpack.c.l.b16 %v324
    %v669 = vunpack.c.h.b16 %v324
    %v670 = vunpack.c.l.b16 %v325
    %v671 = vunpack.c.h.b16 %v325
    %v672 = vunpack.c.l.b16 %v326
    %v673 = vunpack.c.h.b16 %v326
    %v674 = vunpack.c.l.b16 %v327
    %v675 = vunpack.c.h.b16 %v327
    %v676 = vunpack.c.l.b16 %v328
    %v677 = vunpack.c.h.b16 %v328
    %v678 = vunpack.c.l.b16 %v329
    %v679 = vunpack.c.h.b16 %v329
    %v680 = vunpack.c.l.b16 %v330
    %v681 = vunpack.c.h.b16 %v330
    %v682 = vunpack.c.l.b16 %v331
    %v683 = vunpack.c.h.b16 %v331
    %v684 = vunpack.c.l.b16 %v332
    %v685 = vunpack.c.h.b16 %v332
    %v686 = vunpack.c.l.b16 %v333
    %v687 = vunpack.c.h.b16 %v333
    %v688 = vunpack.c.l.b16 %v334
    %v689 = vunpack.c.h.b16 %v334
    %v690 = vunpack.c.l.b16 %v335
    %v691 = vunpack.c.h.b16 %v335
    %v692 = vunpack.c.l.b16 %v336
    %v693 = vunpack.c.h.b16 %v336
    %v694 = vunpack.c.l.b16 %v337
    %v695 = vunpack.c.h.b16 %v337
    %v696 = vunpack.c.l.b16 %v338
    %v697 = vunpack.c.h.b16 %v338
    %v698 = vunpack.c.l.b16 %v339
    %v699 = vunpack.c.h.b16 %v339
    %v700 = vunpack.c.l.b16 %v340
    %v701 = vunpack.c.h.b16 %v340
    %v702 = vunpack.c.l.b16 %v341
    %v703 = vunpack.c.h.b16 %v341
    %v704 = vunpack.c.l.b16 %v342
    %v705 = vunpack.c.h.b16 %v342
    %v706 = vunpack.c.l.b16 %v343
    %v707 = vunpack.c.h.b16 %v343
    %v708 = vunpack.c.l.b16 %v344
    %v709 = vunpack.c.h.b16 %v344
    %v710 = vunpack.c.l.b16 %v345
    %v711 = vunpack.c.h.b16 %v345
    %v712 = vunpack.c.l.b16 %v346
    %v713 = vunpack.c.h.b16 %v346
    %v714 = vunpack.c.l.b16 %v347
    %v715 = vunpack.c.h.b16 %v347
    %v716 = vunpack.c.l.b16 %v348
    %v717 = vunpack.c.h.b16 %v348
    %v718 = vunpack.c.l.b16 %v349
    %v719 = vunpack.c.h.b16 %v349
    %v720 = vunpack.c.l.b16 %v350
    %v721 = vunpack.c.h.b16 %v350
    %v722 = vunpack.c.l.b16 %v351
    %v723 = vunpack.c.h.b16 %v351
    %v724 = vunpack.c.l.b16 %v352
    %v725 = vunpack.c.h.b16 %v352
    %v726 = vunpack.c.l.b16 %v353
    %v727 = vunpack.c.h.b16 %v353
    %v728 = vunpack.c.l.b16 %v354
    %v729 = vunpack.c.h.b16 %v354
    %v730 = vunpack.c.l.b16 %v355
    %v731 = vunpack.c.h.b16 %v355
    %v732 = vunpack.c.l.b16 %v356
    %v733 = vunpack.c.h.b16 %v356
    %v734 = vunpack.c.l.b16 %v357
    %v735 = vunpack.c.h.b16 %v357
    %v736 = vunpack.c.l.b16 %v358
    %v737 = vunpack.c.h.b16 %v358
    %v738 = vunpack.c.l.b16 %v359
    %v739 = vunpack.c.h.b16 %v359
    %v740 = vunpack.c.l.b16 %v360
    %v741 = vunpack.c.h.b16 %v360
    %v742 = vunpack.c.l.b16 %v361
    %v743 = vunpack.c.h.b16 %v361
    %v744 = vunpack.c.l.b16 %v362
    %v745 = vunpack.c.h.b16 %v362
    %v746 = vunpack.c.l.b16 %v363
    %v747 = vunpack.c.h.b16 %v363
    %v748 = vunpack.c.l.b16 %v364
    %v749 = vunpack.c.h.b16 %v364
    %v750 = vunpack.c.l.b16 %v365
    %v751 = vunpack.c.h.b16 %v365
    %v752 = vunpack.c.l.b16 %v366
    %v753 = vunpack.c.h.b16 %v366
    %v754 = vunpack.c.l.b16 %v367
    %v755 = vunpack.c.h.b16 %v367
    %v756 = vunpack.c.l.b16 %v368
    %v757 = vunpack.c.h.b16 %v368
    %v758 = vunpack.c.l.b16 %v369
    %v759 = vunpack.c.h.b16 %v369
    %v760 = vunpack.c.l.b16 %v370
    %v761 = vunpack.c.h.b16 %v370
    %v762 = vunpack.c.l.b16 %v371
    %v763 = vunpack.c.h.b16 %v371
    %v764 = vunpack.c.l.b16 %v372
    %v765 = vunpack.c.h.b16 %v372
    %v766 = vunpack.c.l.b16 %v373
    %v767 = vunpack.c.h.b16 %v373
    %v768 = vunpack.c.l.b16 %v374
    %v769 = vunpack.c.h.b16 %v374
    %v770 = vunpack.c.l.b16 %v375
    %v771 = vunpack.c.h.b16 %v375
    %v772 = vunpack.c.l.b16 %v376
    %v773 = vunpack.c.h.b16 %v376
    %v774 = vunpack.c.l.b16 %v377
    %v775 = vunpack.c.h.b16 %v377
    %v776 = vunpack.c.l.b16 %v378
    %v777 = vunpack.c.h.b16 %v378
    %v778 = vunpack.c.l.b16 %v379
    %v779 = vunpack.c.h.b16 %v379
    %v780 = vunpack.c.l.b16 %v380
    %v781 = vunpack.c.h.b16 %v380
    %v782 = vunpack.c.l.b16 %v381
    %v783 = vunpack.c.h.b16 %v381
    %v784 = vunpack.c.l.b16 %v382
    %v785 = vunpack.c.h.b16 %v382
    %v786 = vunpack.c.l.b16 %v383
    %v787 = vunpack.c.h.b16 %v383
    %v788 = vunpack.c.l.b16 %v384
    %v789 = vunpack.c.h.b16 %v384
    %v790 = vunpack.c.l.b16 %v385
    %v791 = vunpack.c.h.b16 %v385
    %v792 = vpack.c.b16 %v540, %v536
    %v793 = vpack.c.b16 %v541, %v537
    %v794 = vpack.c.b16 %v542, %v538
    %v795 = vpack.c.b16 %v543, %v539
    %v796 = vpack.c.b16 %v548, %v544
    %v797 = vpack.c.b16 %v549, %v545
    %v798 = vpack.c.b16 %v550, %v546
    %v799 = vpack.c.b16 %v551, %v547
    %v800 = vpack.c.b16 %v556, %v552
    %v801 = vpack.c.b16 %v557, %v553
    %v802 = vpack.c.b16 %v558, %v554
    %v803 = vpack.c.b16 %v559, %v555
    %v804 = vpack.c.b16 %v564, %v560
    %v805 = vpack.c.b16 %v565, %v561
    %v806 = vpack.c.b16 %v566, %v562
    %v807 = vpack.c.b16 %v567, %v563
    %v808 = vpack.c.b16 %v572, %v568
    %v809 = vpack.c.b16 %v573, %v569
    %v810 = vpack.c.b16 %v574, %v570
    %v811 = vpack.c.b16 %v575, %v571
    %v812 = vpack.c.b16 %v580, %v576
    %v813 = vpack.c.b16 %v581, %v577
    %v814 = vpack.c.b16 %v582, %v578
    %v815 = vpack.c.b16 %v583, %v579
    %v816 = vpack.c.b16 %v588, %v584
    %v817 = vpack.c.b16 %v589, %v585
    %v818 = vpack.c.b16 %v590, %v586
    %v819 = vpack.c.b16 %v591, %v587
    %v820 = vpack.c.b16 %v596, %v592
    %v821 = vpack.c.b16 %v597, %v593
    %v822 = vpack.c.b16 %v598, %v594
    %v823 = vpack.c.b16 %v599, %v595
    %v824 = vpack.c.b16 %v604, %v600
    %v825 = vpack.c.b16 %v605, %v601
    %v826 = vpack.c.b16 %v606, %v602
    %v827 = vpack.c.b16 %v607, %v603
    %v828 = vpack.c.b16 %v612, %v608
    %v829 = vpack.c.b16 %v613, %v609
    %v830 = vpack.c.b16 %v614, %v610
    %v831 = vpack.c.b16 %v615, %v611
    %v832 = vpack.c.b16 %v620, %v616
    %v833 = vpack.c.b16 %v621, %v617
    %v834 = vpack.c.b16 %v622, %v618
    %v835 = vpack.c.b16 %v623, %v619
    %v836 = vpack.c.b16 %v628, %v624
    %v837 = vpack.c.b16 %v629, %v625
    %v838 = vpack.c.b16 %v630, %v626
    %v839 = vpack.c.b16 %v631, %v627
    %v840 = vpack.c.b16 %v636, %v632
    %v841 = vpack.c.b16 %v637, %v633
    %v842 = vpack.c.b16 %v638, %v634
    %v843 = vpack.c.b16 %v639, %v635
    %v844 = vpack.c.b16 %v644, %v640
    %v845 = vpack.c.b16 %v645, %v641
    %v846 = vpack.c.b16 %v646, %v642
    %v847 = vpack.c.b16 %v647, %v643
    %v848 = vpack.c.b16 %v652, %v648
    %v849 = vpack.c.b16 %v653, %v649
    %v850 = vpack.c.b16 %v654, %v650
    %v851 = vpack.c.b16 %v655, %v651
    %v852 = vpack.c.b16 %v660, %v656
    %v853 = vpack.c.b16 %v661, %v657
    %v854 = vpack.c.b16 %v662, %v658
    %v855 = vpack.c.b16 %v663, %v659
    %v856 = vpack.c.b16 %v668, %v664
    %v857 = vpack.c.b16 %v669, %v665
    %v858 = vpack.c.b16 %v670, %v666
    %v859 = vpack.c.b16 %v671, %v667
    %v860 = vpack.c.b16 %v676, %v672
    %v861 = vpack.c.b16 %v677, %v673
    %v862 = vpack.c.b16 %v678, %v674
    %v863 = vpack.c.b16 %v679, %v675
    %v864 = vpack.c.b16 %v684, %v680
    %v865 = vpack.c.b16 %v685, %v681
    %v866 = vpack.c.b16 %v686, %v682
    %v867 = vpack.c.b16 %v687, %v683
    %v868 = vpack.c.b16 %v692, %v688
    %v869 = vpack.c.b16 %v693, %v689
    %v870 = vpack.c.b16 %v694, %v690
    %v871 = vpack.c.b16 %v695, %v691
    %v872 = vpack.c.b16 %v700, %v696
    %v873 = vpack.c.b16 %v701, %v697
    %v874 = vpack.c.b16 %v702, %v698
    %v875 = vpack.c.b16 %v703, %v699
    %v876 = vpack.c.b16 %v708, %v704
    %v877 = vpack.c.b16 %v709, %v705
    %v878 = vpack.c.b16 %v710, %v706
    %v879 = vpack.c.b16 %v711, %v707
    %v880 = vpack.c.b16 %v716, %v712
    %v881 = vpack.c.b16 %v717, %v713
    %v882 = vpack.c.b16 %v718, %v714
    %v883 = vpack.c.b16 %v719, %v715
    %v884 = vpack.c.b16 %v724, %v720
    %v885 = vpack.c.b16 %v725, %v721
    %v886 = vpack.c.b16 %v726, %v722
    %v887 = vpack.c.b16 %v727, %v723
    %v888 = vpack.c.b16 %v732, %v728
    %v889 = vpack.c.b16 %v733, %v729
    %v890 = vpack.c.b16 %v734, %v730
    %v891 = vpack.c.b16 %v735, %v731
    %v892 = vpack.c.b16 %v740, %v736
    %v893 = vpack.c.b16 %v741, %v737
    %v894 = vpack.c.b16 %v742, %v738
    %v895 = vpack.c.b16 %v743, %v739
    %v896 = vpack.c.b16 %v748, %v744
    %v897 = vpack.c.b16 %v749, %v745
    %v898 = vpack.c.b16 %v750, %v746
    %v899 = vpack.c.b16 %v751, %v747
    %v900 = vpack.c.b16 %v756, %v752
    %v901 = vpack.c.b16 %v757, %v753
    %v902 = vpack.c.b16 %v758, %v754
    %v903 = vpack.c.b16 %v759, %v755
    %v904 = vpack.c.b16 %v764, %v760
    %v905 = vpack.c.b16 %v765, %v761
    %v906 = vpack.c.b16 %v766, %v762
    %v907 = vpack.c.b16 %v767, %v763
    %v908 = vpack.c.b16 %v772, %v768
    %v909 = vpack.c.b16 %v773, %v769
    %v910 = vpack.c.b16 %v774, %v770
    %v911 = vpack.c.b16 %v775, %v771
    %v912 = vpack.c.b16 %v780, %v776
    %v913 = vpack.c.b16 %v781, %v777
    %v914 = vpack.c.b16 %v782, %v778
    %v915 = vpack.c.b16 %v783, %v779
    %v916 = vpack.c.b16 %v788, %v784
    %v917 = vpack.c.b16 %v789, %v785
    %v918 = vpack.c.b16 %v790, %v786
    %v919 = vpack.c.b16 %v791, %v787
    %1048 = vmatprep.subr.bf16.mxu0 %v793
    %1049 = vmatpush1.bf16.msra.mxu0 %v792
    %1050 = vmatprep.subr.bf16.mxu0 %v797
    %1051 = vmatpush1.bf16.msra.mxu0 %v796
    %1052 = vmatprep.subr.bf16.mxu0 %v801
    %1053 = vmatpush1.bf16.msra.mxu0 %v800
    %1054 = vmatprep.subr.bf16.mxu0 %v805
    %1055 = vmatpush1.bf16.msra.mxu0 %v804
    %1056 = vmatprep.subr.bf16.mxu0 %v809
    %1057 = vmatpush1.bf16.msra.mxu0 %v808
    %1058 = vmatprep.subr.bf16.mxu0 %v813
    %1059 = vmatpush1.bf16.msra.mxu0 %v812
    %1060 = vmatprep.subr.bf16.mxu0 %v817
    %1061 = vmatpush1.bf16.msra.mxu0 %v816
    %1062 = vmatprep.subr.bf16.mxu0 %v821
    %1063 = vmatpush1.bf16.msra.mxu0 %v820
    %1064 = vmatprep.subr.bf16.mxu0 %v825
    %1065 = vmatpush1.bf16.msra.mxu0 %v824
    %1066 = vmatprep.subr.bf16.mxu0 %v829
    %1067 = vmatpush1.bf16.msra.mxu0 %v828
    %1068 = vmatprep.subr.bf16.mxu0 %v833
    %1069 = vmatpush1.bf16.msra.mxu0 %v832
    %1070 = vmatprep.subr.bf16.mxu0 %v837
    %1071 = vmatpush1.bf16.msra.mxu0 %v836
    %1072 = vmatprep.subr.bf16.mxu0 %v841
    %1073 = vmatpush1.bf16.msra.mxu0 %v840
    %1074 = vmatprep.subr.bf16.mxu0 %v845
    %1075 = vmatpush1.bf16.msra.mxu0 %v844
    %1076 = vmatprep.subr.bf16.mxu0 %v849
    %1077 = vmatpush1.bf16.msra.mxu0 %v848
    %1078 = vmatprep.subr.bf16.mxu0 %v853
    %1079 = vmatpush1.bf16.msra.mxu0 %v852
    %1080 = vmatprep.mubr.bf16.mxu0 %v255
    %1081 = vmatmul.mubr.bf16.gmra.mrb[0].mxu0 %v254
    %v1082 = vpop.f32.mrb[0].mxu0
    %v1083 = vadd.f32 %v391, %v1082
    %v1084 = vpop.f32.mrb[0].mxu0
    %v1085 = vadd.f32 %v395, %v1084
    %v1086 = vpop.f32.mrb[0].mxu0
    %v1087 = vpop.f32.mrb[0].mxu0
    %1088 = vdwg.mxu0
    %1089 = vmatprep.subr.bf16.mxu0 %v857
    %1090 = vmatpush1.bf16.msra.mxu0 %v856
    %1091 = vmatprep.subr.bf16.mxu0 %v861
    %1092 = vmatpush1.bf16.msra.mxu0 %v860
    %1093 = vmatprep.subr.bf16.mxu0 %v865
    %1094 = vmatpush1.bf16.msra.mxu0 %v864
    %1095 = vmatprep.subr.bf16.mxu0 %v869
    %1096 = vmatpush1.bf16.msra.mxu0 %v868
    %1097 = vmatprep.subr.bf16.mxu0 %v873
    %1098 = vmatpush1.bf16.msra.mxu0 %v872
    %1099 = vmatprep.subr.bf16.mxu0 %v877
    %1100 = vmatpush1.bf16.msra.mxu0 %v876
    %1101 = vmatprep.subr.bf16.mxu0 %v881
    %1102 = vmatpush1.bf16.msra.mxu0 %v880
    %1103 = vmatprep.subr.bf16.mxu0 %v885
    %1104 = vmatpush1.bf16.msra.mxu0 %v884
    %1105 = vmatprep.subr.bf16.mxu0 %v889
    %1106 = vmatpush1.bf16.msra.mxu0 %v888
    %1107 = vmatprep.subr.bf16.mxu0 %v893
    %1108 = vmatpush1.bf16.msra.mxu0 %v892
    %1109 = vmatprep.subr.bf16.mxu0 %v897
    %1110 = vmatpush1.bf16.msra.mxu0 %v896
    %1111 = vmatprep.subr.bf16.mxu0 %v901
    %1112 = vmatpush1.bf16.msra.mxu0 %v900
    %1113 = vmatprep.subr.bf16.mxu0 %v905
    %1114 = vmatpush1.bf16.msra.mxu0 %v904
    %1115 = vmatprep.subr.bf16.mxu0 %v909
    %1116 = vmatpush1.bf16.msra.mxu0 %v908
    %1117 = vmatprep.subr.bf16.mxu0 %v913
    %1118 = vmatpush1.bf16.msra.mxu0 %v912
    %1119 = vmatprep.subr.bf16.mxu0 %v917
    %1120 = vmatpush1.bf16.msra.mxu0 %v916
    %1121 = vmatprep.mubr.bf16.mxu0 %v257
    %1122 = vmatmul.mubr.bf16.gmra.mrb[0].mxu0 %v256
    %v1123 = vpop.f32.mrb[0].mxu0
    %v1124 = vadd.f32 %v1083, %v1123
    %v1125 = vpop.f32.mrb[0].mxu0
    %v1126 = vadd.f32 %v1085, %v1125
    %v1127 = vpop.f32.mrb[0].mxu0
    %v1128 = vpop.f32.mrb[0].mxu0
    %1129 = vdwg.mxu0
    %1130 = vmatprep.subr.bf16.mxu0 %v795
    %1131 = vmatpush1.bf16.msra.mxu0 %v794
    %1132 = vmatprep.subr.bf16.mxu0 %v799
    %1133 = vmatpush1.bf16.msra.mxu0 %v798
    %1134 = vmatprep.subr.bf16.mxu0 %v803
    %1135 = vmatpush1.bf16.msra.mxu0 %v802
    %1136 = vmatprep.subr.bf16.mxu0 %v807
    %1137 = vmatpush1.bf16.msra.mxu0 %v806
    %1138 = vmatprep.subr.bf16.mxu0 %v811
    %1139 = vmatpush1.bf16.msra.mxu0 %v810
    %1140 = vmatprep.subr.bf16.mxu0 %v815
    %1141 = vmatpush1.bf16.msra.mxu0 %v814
    %1142 = vmatprep.subr.bf16.mxu0 %v819
    %1143 = vmatpush1.bf16.msra.mxu0 %v818
    %1144 = vmatprep.subr.bf16.mxu0 %v823
    %1145 = vmatpush1.bf16.msra.mxu0 %v822
    %1146 = vmatprep.subr.bf16.mxu0 %v827
    %1147 = vmatpush1.bf16.msra.mxu0 %v826
    %1148 = vmatprep.subr.bf16.mxu0 %v831
    %1149 = vmatpush1.bf16.msra.mxu0 %v830
    %1150 = vmatprep.subr.bf16.mxu0 %v835
    %1151 = vmatpush1.bf16.msra.mxu0 %v834
    %1152 = vmatprep.subr.bf16.mxu0 %v839
    %1153 = vmatpush1.bf16.msra.mxu0 %v838
    %1154 = vmatprep.subr.bf16.mxu0 %v843
    %1155 = vmatpush1.bf16.msra.mxu0 %v842
    %1156 = vmatprep.subr.bf16.mxu0 %v847
    %1157 = vmatpush1.bf16.msra.mxu0 %v846
    %1158 = vmatprep.subr.bf16.mxu0 %v851
    %1159 = vmatpush1.bf16.msra.mxu0 %v850
    %1160 = vmatprep.subr.bf16.mxu0 %v855
    %1161 = vmatpush1.bf16.msra.mxu0 %v854
    %1162 = vmatprep.mubr.bf16.mxu0 %v255
    %1163 = vmatmul.mubr.bf16.gmra.mrb[0].mxu0 %v254
    %v1164 = vpop.f32.mrb[0].mxu0
    %v1165 = vadd.f32 %v399, %v1164
    %v1166 = vpop.f32.mrb[0].mxu0
    %v1167 = vadd.f32 %v403, %v1166
    %v1168 = vpop.f32.mrb[0].mxu0
    %v1169 = vpop.f32.mrb[0].mxu0
    %1170 = vdwg.mxu0
    %1171 = vmatprep.subr.bf16.mxu0 %v859
    %1172 = vmatpush1.bf16.msra.mxu0 %v858
    %1173 = vmatprep.subr.bf16.mxu0 %v863
    %1174 = vmatpush1.bf16.msra.mxu0 %v862
    %1175 = vmatprep.subr.bf16.mxu0 %v867
    %1176 = vmatpush1.bf16.msra.mxu0 %v866
    %1177 = vmatprep.subr.bf16.mxu0 %v871
    %1178 = vmatpush1.bf16.msra.mxu0 %v870
    %1179 = vmatprep.subr.bf16.mxu0 %v875
    %1180 = vmatpush1.bf16.msra.mxu0 %v874
    %1181 = vmatprep.subr.bf16.mxu0 %v879
    %1182 = vmatpush1.bf16.msra.mxu0 %v878
    %1183 = vmatprep.subr.bf16.mxu0 %v883
    %1184 = vmatpush1.bf16.msra.mxu0 %v882
    %1185 = vmatprep.subr.bf16.mxu0 %v887
    %1186 = vmatpush1.bf16.msra.mxu0 %v886
    %1187 = vmatprep.subr.bf16.mxu0 %v891
    %1188 = vmatpush1.bf16.msra.mxu0 %v890
    %1189 = vmatprep.subr.bf16.mxu0 %v895
    %1190 = vmatpush1.bf16.msra.mxu0 %v894
    %1191 = vmatprep.subr.bf16.mxu0 %v899
    %1192 = vmatpush1.bf16.msra.mxu0 %v898
    %1193 = vmatprep.subr.bf16.mxu0 %v903
    %1194 = vmatpush1.bf16.msra.mxu0 %v902
    %1195 = vmatprep.subr.bf16.mxu0 %v907
    %1196 = vmatpush1.bf16.msra.mxu0 %v906
    %1197 = vmatprep.subr.bf16.mxu0 %v911
    %1198 = vmatpush1.bf16.msra.mxu0 %v910
    %1199 = vmatprep.subr.bf16.mxu0 %v915
    %1200 = vmatpush1.bf16.msra.mxu0 %v914
    %1201 = vmatprep.subr.bf16.mxu0 %v919
    %1202 = vmatpush1.bf16.msra.mxu0 %v918
    %1203 = vmatprep.mubr.bf16.mxu0 %v257
    %1204 = vmatmul.mubr.bf16.gmra.mrb[0].mxu0 %v256
    %v1205 = vpop.f32.mrb[0].mxu0
    %v1206 = vadd.f32 %v1165, %v1205
    %v1207 = vpop.f32.mrb[0].mxu0
    %v1208 = vadd.f32 %v1167, %v1207
    %v1209 = vpop.f32.mrb[0].mxu0
    %v1210 = vpop.f32.mrb[0].mxu0
    %1211 = vdwg.mxu0
    %v1212 = vmul.f32 %v1124, 0.2
    %v1213 = vmul.f32 %v1126, 0.2
    %v1214 = vmul.f32 %v1206, 0.2
    %v1215 = vmul.f32 %v1208, 0.2
    %v1216 = vmax.f32 %v1124, %v1212
    %v1217 = vmax.f32 %v1126, %v1213
    %v1218 = vmax.f32 %v1206, %v1214
    %v1219 = vmax.f32 %v1208, %v1215
    %v1220 = vpack.c.bf16 %v1216, %v1216
    %v1221 = vpack.c.bf16 %v1217, %v1217
    %v1222 = vpack.c.bf16 %v1218, %v1218
    %v1223 = vpack.c.bf16 %v1219, %v1219
    %v1224 = vld [vmem:[#allocation8] sm:$0xff]
    %v1225 = vld [vmem:[#allocation8 + $0x8] sm:$0xff]
    %v1226 = vld [vmem:[#allocation8 + $0x10] sm:$0xff]
    %v1227 = vld [vmem:[#allocation8 + $0x18] sm:$0xff]
    %v1228 = vld [vmem:[#allocation8 + $0x20] sm:$0xff]
    %v1229 = vld [vmem:[#allocation8 + $0x28] sm:$0xff]
    %v1230 = vld [vmem:[#allocation8 + $0x30] sm:$0xff]
    %v1231 = vld [vmem:[#allocation8 + $0x38] sm:$0xff]
    %v1232 = vld [vmem:[#allocation8 + $0x40] sm:$0xff]
    %v1233 = vld [vmem:[#allocation8 + $0x48] sm:$0xff]
    %v1234 = vld [vmem:[#allocation8 + $0x50] sm:$0xff]
    %v1235 = vld [vmem:[#allocation8 + $0x58] sm:$0xff]
    %v1236 = vld [vmem:[#allocation8 + $0x60] sm:$0xff]
    %v1237 = vld [vmem:[#allocation8 + $0x68] sm:$0xff]
    %v1238 = vld [vmem:[#allocation8 + $0x70] sm:$0xff]
    %v1239 = vld [vmem:[#allocation8 + $0x78] sm:$0xff]
    %v1240 = vld [vmem:[#allocation8 + $0x80] sm:$0xff]
    %v1241 = vld [vmem:[#allocation8 + $0x88] sm:$0xff]
    %v1242 = vld [vmem:[#allocation8 + $0x90] sm:$0xff]
    %v1243 = vld [vmem:[#allocation8 + $0x98] sm:$0xff]
    %v1244 = vld [vmem:[#allocation8 + $0xa0] sm:$0xff]
    %v1245 = vld [vmem:[#allocation8 + $0xa8] sm:$0xff]
    %v1246 = vld [vmem:[#allocation8 + $0xb0] sm:$0xff]
    %v1247 = vld [vmem:[#allocation8 + $0xb8] sm:$0xff]
    %v1248 = vld [vmem:[#allocation8 + $0xc0] sm:$0xff]
    %v1249 = vld [vmem:[#allocation8 + $0xc8] sm:$0xff]
    %v1250 = vld [vmem:[#allocation8 + $0xd0] sm:$0xff]
    %v1251 = vld [vmem:[#allocation8 + $0xd8] sm:$0xff]
    %v1252 = vld [vmem:[#allocation8 + $0xe0] sm:$0xff]
    %v1253 = vld [vmem:[#allocation8 + $0xe8] sm:$0xff]
    %v1254 = vld [vmem:[#allocation8 + $0xf0] sm:$0xff]
    %v1255 = vld [vmem:[#allocation8 + $0xf8] sm:$0xff]
    %v1256 = vld [vmem:[#allocation8 + $0x100] sm:$0xff]
    %v1257 = vld [vmem:[#allocation8 + $0x108] sm:$0xff]
    %v1258 = vld [vmem:[#allocation8 + $0x110] sm:$0xff]
    %v1259 = vld [vmem:[#allocation8 + $0x118] sm:$0xff]
    %v1260 = vld [vmem:[#allocation8 + $0x120] sm:$0xff]
    %v1261 = vld [vmem:[#allocation8 + $0x128] sm:$0xff]
    %v1262 = vld [vmem:[#allocation8 + $0x130] sm:$0xff]
    %v1263 = vld [vmem:[#allocation8 + $0x138] sm:$0xff]
    %v1264 = vld [vmem:[#allocation8 + $0x140] sm:$0xff]
    %v1265 = vld [vmem:[#allocation8 + $0x148] sm:$0xff]
    %v1266 = vld [vmem:[#allocation8 + $0x150] sm:$0xff]
    %v1267 = vld [vmem:[#allocation8 + $0x158] sm:$0xff]
    %v1268 = vld [vmem:[#allocation8 + $0x160] sm:$0xff]
    %v1269 = vld [vmem:[#allocation8 + $0x168] sm:$0xff]
    %v1270 = vld [vmem:[#allocation8 + $0x170] sm:$0xff]
    %v1271 = vld [vmem:[#allocation8 + $0x178] sm:$0xff]
    %v1272 = vld [vmem:[#allocation8 + $0x180] sm:$0xff]
    %v1273 = vld [vmem:[#allocation8 + $0x188] sm:$0xff]
    %v1274 = vld [vmem:[#allocation8 + $0x190] sm:$0xff]
    %v1275 = vld [vmem:[#allocation8 + $0x198] sm:$0xff]
    %v1276 = vld [vmem:[#allocation8 + $0x1a0] sm:$0xff]
    %v1277 = vld [vmem:[#allocation8 + $0x1a8] sm:$0xff]
    %v1278 = vld [vmem:[#allocation8 + $0x1b0] sm:$0xff]
    %v1279 = vld [vmem:[#allocation8 + $0x1b8] sm:$0xff]
    %v1280 = vld [vmem:[#allocation8 + $0x1c0] sm:$0xff]
    %v1281 = vld [vmem:[#allocation8 + $0x1c8] sm:$0xff]
    %v1282 = vld [vmem:[#allocation8 + $0x1d0] sm:$0xff]
    %v1283 = vld [vmem:[#allocation8 + $0x1d8] sm:$0xff]
    %v1284 = vld [vmem:[#allocation8 + $0x1e0] sm:$0xff]
    %v1285 = vld [vmem:[#allocation8 + $0x1e8] sm:$0xff]
    %v1286 = vld [vmem:[#allocation8 + $0x1f0] sm:$0xff]
    %v1287 = vld [vmem:[#allocation8 + $0x1f8] sm:$0xff]
    %v1288 = vld [vmem:[#allocation8 + $0x200] sm:$0xff]
    %v1289 = vld [vmem:[#allocation8 + $0x208] sm:$0xff]
    %v1290 = vld [vmem:[#allocation8 + $0x210] sm:$0xff]
    %v1291 = vld [vmem:[#allocation8 + $0x218] sm:$0xff]
    %v1292 = vld [vmem:[#allocation8 + $0x220] sm:$0xff]
    %v1293 = vld [vmem:[#allocation8 + $0x228] sm:$0xff]
    %v1294 = vld [vmem:[#allocation8 + $0x230] sm:$0xff]
    %v1295 = vld [vmem:[#allocation8 + $0x238] sm:$0xff]
    %v1296 = vld [vmem:[#allocation8 + $0x240] sm:$0xff]
    %v1297 = vld [vmem:[#allocation8 + $0x248] sm:$0xff]
    %v1298 = vld [vmem:[#allocation8 + $0x250] sm:$0xff]
    %v1299 = vld [vmem:[#allocation8 + $0x258] sm:$0xff]
    %v1300 = vld [vmem:[#allocation8 + $0x260] sm:$0xff]
    %v1301 = vld [vmem:[#allocation8 + $0x268] sm:$0xff]
    %v1302 = vld [vmem:[#allocation8 + $0x270] sm:$0xff]
    %v1303 = vld [vmem:[#allocation8 + $0x278] sm:$0xff]
    %v1304 = vld [vmem:[#allocation8 + $0x280] sm:$0xff]
    %v1305 = vld [vmem:[#allocation8 + $0x288] sm:$0xff]
    %v1306 = vld [vmem:[#allocation8 + $0x290] sm:$0xff]
    %v1307 = vld [vmem:[#allocation8 + $0x298] sm:$0xff]
    %v1308 = vld [vmem:[#allocation8 + $0x2a0] sm:$0xff]
    %v1309 = vld [vmem:[#allocation8 + $0x2a8] sm:$0xff]
    %v1310 = vld [vmem:[#allocation8 + $0x2b0] sm:$0xff]
    %v1311 = vld [vmem:[#allocation8 + $0x2b8] sm:$0xff]
    %v1312 = vld [vmem:[#allocation8 + $0x2c0] sm:$0xff]
    %v1313 = vld [vmem:[#allocation8 + $0x2c8] sm:$0xff]
    %v1314 = vld [vmem:[#allocation8 + $0x2d0] sm:$0xff]
    %v1315 = vld [vmem:[#allocation8 + $0x2d8] sm:$0xff]
    %v1316 = vld [vmem:[#allocation8 + $0x2e0] sm:$0xff]
    %v1317 = vld [vmem:[#allocation8 + $0x2e8] sm:$0xff]
    %v1318 = vld [vmem:[#allocation8 + $0x2f0] sm:$0xff]
    %v1319 = vld [vmem:[#allocation8 + $0x2f8] sm:$0xff]
    %v1320 = vld [vmem:[#allocation8 + $0x300] sm:$0xff]
    %v1321 = vld [vmem:[#allocation8 + $0x308] sm:$0xff]
    %v1322 = vld [vmem:[#allocation8 + $0x310] sm:$0xff]
    %v1323 = vld [vmem:[#allocation8 + $0x318] sm:$0xff]
    %v1324 = vld [vmem:[#allocation8 + $0x320] sm:$0xff]
    %v1325 = vld [vmem:[#allocation8 + $0x328] sm:$0xff]
    %v1326 = vld [vmem:[#allocation8 + $0x330] sm:$0xff]
    %v1327 = vld [vmem:[#allocation8 + $0x338] sm:$0xff]
    %v1328 = vld [vmem:[#allocation8 + $0x340] sm:$0xff]
    %v1329 = vld [vmem:[#allocation8 + $0x348] sm:$0xff]
    %v1330 = vld [vmem:[#allocation8 + $0x350] sm:$0xff]
    %v1331 = vld [vmem:[#allocation8 + $0x358] sm:$0xff]
    %v1332 = vld [vmem:[#allocation8 + $0x360] sm:$0xff]
    %v1333 = vld [vmem:[#allocation8 + $0x368] sm:$0xff]
    %v1334 = vld [vmem:[#allocation8 + $0x370] sm:$0xff]
    %v1335 = vld [vmem:[#allocation8 + $0x378] sm:$0xff]
    %v1336 = vld [vmem:[#allocation8 + $0x380] sm:$0xff]
    %v1337 = vld [vmem:[#allocation8 + $0x388] sm:$0xff]
    %v1338 = vld [vmem:[#allocation8 + $0x390] sm:$0xff]
    %v1339 = vld [vmem:[#allocation8 + $0x398] sm:$0xff]
    %v1340 = vld [vmem:[#allocation8 + $0x3a0] sm:$0xff]
    %v1341 = vld [vmem:[#allocation8 + $0x3a8] sm:$0xff]
    %v1342 = vld [vmem:[#allocation8 + $0x3b0] sm:$0xff]
    %v1343 = vld [vmem:[#allocation8 + $0x3b8] sm:$0xff]
    %v1344 = vld [vmem:[#allocation8 + $0x3c0] sm:$0xff]
    %v1345 = vld [vmem:[#allocation8 + $0x3c8] sm:$0xff]
    %v1346 = vld [vmem:[#allocation8 + $0x3d0] sm:$0xff]
    %v1347 = vld [vmem:[#allocation8 + $0x3d8] sm:$0xff]
    %v1348 = vld [vmem:[#allocation8 + $0x3e0] sm:$0xff]
    %v1349 = vld [vmem:[#allocation8 + $0x3e8] sm:$0xff]
    %v1350 = vld [vmem:[#allocation8 + $0x3f0] sm:$0xff]
    %v1351 = vld [vmem:[#allocation8 + $0x3f8] sm:$0xff]
    %v1352 = vld [vmem:[%s6] sm:$0xf]
    %v1354 = vlaneseq
    %v1355 = vshrl.u32 %v1354, 7
    %v1356 = vsub.s32 0, %v1355
    %v1357 = vrot.slane %v1352, %v1356
    %v1358 = vlaneseq
    %v1359 = vshrl.u32 %v1358, 7
    %v1360 = vsub.s32 1, %v1359
    %v1361 = vrot.slane %v1352, %v1360
    %v1362 = vlaneseq
    %v1363 = vshrl.u32 %v1362, 7
    %v1364 = vsub.s32 2, %v1363
    %v1365 = vrot.slane %v1352, %v1364
    %v1366 = vlaneseq
    %v1367 = vshrl.u32 %v1366, 7
    %v1368 = vsub.s32 3, %v1367
    %v1369 = vrot.slane %v1352, %v1368
    %v1502 = vunpack.c.l.b16 %v1224
    %v1503 = vunpack.c.h.b16 %v1224
    %v1504 = vunpack.c.l.b16 %v1225
    %v1505 = vunpack.c.h.b16 %v1225
    %v1506 = vunpack.c.l.b16 %v1226
    %v1507 = vunpack.c.h.b16 %v1226
    %v1508 = vunpack.c.l.b16 %v1227
    %v1509 = vunpack.c.h.b16 %v1227
    %v1510 = vunpack.c.l.b16 %v1228
    %v1511 = vunpack.c.h.b16 %v1228
    %v1512 = vunpack.c.l.b16 %v1229
    %v1513 = vunpack.c.h.b16 %v1229
    %v1514 = vunpack.c.l.b16 %v1230
    %v1515 = vunpack.c.h.b16 %v1230
    %v1516 = vunpack.c.l.b16 %v1231
    %v1517 = vunpack.c.h.b16 %v1231
    %v1518 = vunpack.c.l.b16 %v1232
    %v1519 = vunpack.c.h.b16 %v1232
    %v1520 = vunpack.c.l.b16 %v1233
    %v1521 = vunpack.c.h.b16 %v1233
    %v1522 = vunpack.c.l.b16 %v1234
    %v1523 = vunpack.c.h.b16 %v1234
    %v1524 = vunpack.c.l.b16 %v1235
    %v1525 = vunpack.c.h.b16 %v1235
    %v1526 = vunpack.c.l.b16 %v1236
    %v1527 = vunpack.c.h.b16 %v1236
    %v1528 = vunpack.c.l.b16 %v1237
    %v1529 = vunpack.c.h.b16 %v1237
    %v1530 = vunpack.c.l.b16 %v1238
    %v1531 = vunpack.c.h.b16 %v1238
    %v1532 = vunpack.c.l.b16 %v1239
    %v1533 = vunpack.c.h.b16 %v1239
    %v1534 = vunpack.c.l.b16 %v1240
    %v1535 = vunpack.c.h.b16 %v1240
    %v1536 = vunpack.c.l.b16 %v1241
    %v1537 = vunpack.c.h.b16 %v1241
    %v1538 = vunpack.c.l.b16 %v1242
    %v1539 = vunpack.c.h.b16 %v1242
    %v1540 = vunpack.c.l.b16 %v1243
    %v1541 = vunpack.c.h.b16 %v1243
    %v1542 = vunpack.c.l.b16 %v1244
    %v1543 = vunpack.c.h.b16 %v1244
    %v1544 = vunpack.c.l.b16 %v1245
    %v1545 = vunpack.c.h.b16 %v1245
    %v1546 = vunpack.c.l.b16 %v1246
    %v1547 = vunpack.c.h.b16 %v1246
    %v1548 = vunpack.c.l.b16 %v1247
    %v1549 = vunpack.c.h.b16 %v1247
    %v1550 = vunpack.c.l.b16 %v1248
    %v1551 = vunpack.c.h.b16 %v1248
    %v1552 = vunpack.c.l.b16 %v1249
    %v1553 = vunpack.c.h.b16 %v1249
    %v1554 = vunpack.c.l.b16 %v1250
    %v1555 = vunpack.c.h.b16 %v1250
    %v1556 = vunpack.c.l.b16 %v1251
    %v1557 = vunpack.c.h.b16 %v1251
    %v1558 = vunpack.c.l.b16 %v1252
    %v1559 = vunpack.c.h.b16 %v1252
    %v1560 = vunpack.c.l.b16 %v1253
    %v1561 = vunpack.c.h.b16 %v1253
    %v1562 = vunpack.c.l.b16 %v1254
    %v1563 = vunpack.c.h.b16 %v1254
    %v1564 = vunpack.c.l.b16 %v1255
    %v1565 = vunpack.c.h.b16 %v1255
    %v1566 = vunpack.c.l.b16 %v1256
    %v1567 = vunpack.c.h.b16 %v1256
    %v1568 = vunpack.c.l.b16 %v1257
    %v1569 = vunpack.c.h.b16 %v1257
    %v1570 = vunpack.c.l.b16 %v1258
    %v1571 = vunpack.c.h.b16 %v1258
    %v1572 = vunpack.c.l.b16 %v1259
    %v1573 = vunpack.c.h.b16 %v1259
    %v1574 = vunpack.c.l.b16 %v1260
    %v1575 = vunpack.c.h.b16 %v1260
    %v1576 = vunpack.c.l.b16 %v1261
    %v1577 = vunpack.c.h.b16 %v1261
    %v1578 = vunpack.c.l.b16 %v1262
    %v1579 = vunpack.c.h.b16 %v1262
    %v1580 = vunpack.c.l.b16 %v1263
    %v1581 = vunpack.c.h.b16 %v1263
    %v1582 = vunpack.c.l.b16 %v1264
    %v1583 = vunpack.c.h.b16 %v1264
    %v1584 = vunpack.c.l.b16 %v1265
    %v1585 = vunpack.c.h.b16 %v1265
    %v1586 = vunpack.c.l.b16 %v1266
    %v1587 = vunpack.c.h.b16 %v1266
    %v1588 = vunpack.c.l.b16 %v1267
    %v1589 = vunpack.c.h.b16 %v1267
    %v1590 = vunpack.c.l.b16 %v1268
    %v1591 = vunpack.c.h.b16 %v1268
    %v1592 = vunpack.c.l.b16 %v1269
    %v1593 = vunpack.c.h.b16 %v1269
    %v1594 = vunpack.c.l.b16 %v1270
    %v1595 = vunpack.c.h.b16 %v1270
    %v1596 = vunpack.c.l.b16 %v1271
    %v1597 = vunpack.c.h.b16 %v1271
    %v1598 = vunpack.c.l.b16 %v1272
    %v1599 = vunpack.c.h.b16 %v1272
    %v1600 = vunpack.c.l.b16 %v1273
    %v1601 = vunpack.c.h.b16 %v1273
    %v1602 = vunpack.c.l.b16 %v1274
    %v1603 = vunpack.c.h.b16 %v1274
    %v1604 = vunpack.c.l.b16 %v1275
    %v1605 = vunpack.c.h.b16 %v1275
    %v1606 = vunpack.c.l.b16 %v1276
    %v1607 = vunpack.c.h.b16 %v1276
    %v1608 = vunpack.c.l.b16 %v1277
    %v1609 = vunpack.c.h.b16 %v1277
    %v1610 = vunpack.c.l.b16 %v1278
    %v1611 = vunpack.c.h.b16 %v1278
    %v1612 = vunpack.c.l.b16 %v1279
    %v1613 = vunpack.c.h.b16 %v1279
    %v1614 = vunpack.c.l.b16 %v1280
    %v1615 = vunpack.c.h.b16 %v1280
    %v1616 = vunpack.c.l.b16 %v1281
    %v1617 = vunpack.c.h.b16 %v1281
    %v1618 = vunpack.c.l.b16 %v1282
    %v1619 = vunpack.c.h.b16 %v1282
    %v1620 = vunpack.c.l.b16 %v1283
    %v1621 = vunpack.c.h.b16 %v1283
    %v1622 = vunpack.c.l.b16 %v1284
    %v1623 = vunpack.c.h.b16 %v1284
    %v1624 = vunpack.c.l.b16 %v1285
    %v1625 = vunpack.c.h.b16 %v1285
    %v1626 = vunpack.c.l.b16 %v1286
    %v1627 = vunpack.c.h.b16 %v1286
    %v1628 = vunpack.c.l.b16 %v1287
    %v1629 = vunpack.c.h.b16 %v1287
    %v1630 = vunpack.c.l.b16 %v1288
    %v1631 = vunpack.c.h.b16 %v1288
    %v1632 = vunpack.c.l.b16 %v1289
    %v1633 = vunpack.c.h.b16 %v1289
    %v1634 = vunpack.c.l.b16 %v1290
    %v1635 = vunpack.c.h.b16 %v1290
    %v1636 = vunpack.c.l.b16 %v1291
    %v1637 = vunpack.c.h.b16 %v1291
    %v1638 = vunpack.c.l.b16 %v1292
    %v1639 = vunpack.c.h.b16 %v1292
    %v1640 = vunpack.c.l.b16 %v1293
    %v1641 = vunpack.c.h.b16 %v1293
    %v1642 = vunpack.c.l.b16 %v1294
    %v1643 = vunpack.c.h.b16 %v1294
    %v1644 = vunpack.c.l.b16 %v1295
    %v1645 = vunpack.c.h.b16 %v1295
    %v1646 = vunpack.c.l.b16 %v1296
    %v1647 = vunpack.c.h.b16 %v1296
    %v1648 = vunpack.c.l.b16 %v1297
    %v1649 = vunpack.c.h.b16 %v1297
    %v1650 = vunpack.c.l.b16 %v1298
    %v1651 = vunpack.c.h.b16 %v1298
    %v1652 = vunpack.c.l.b16 %v1299
    %v1653 = vunpack.c.h.b16 %v1299
    %v1654 = vunpack.c.l.b16 %v1300
    %v1655 = vunpack.c.h.b16 %v1300
    %v1656 = vunpack.c.l.b16 %v1301
    %v1657 = vunpack.c.h.b16 %v1301
    %v1658 = vunpack.c.l.b16 %v1302
    %v1659 = vunpack.c.h.b16 %v1302
    %v1660 = vunpack.c.l.b16 %v1303
    %v1661 = vunpack.c.h.b16 %v1303
    %v1662 = vunpack.c.l.b16 %v1304
    %v1663 = vunpack.c.h.b16 %v1304
    %v1664 = vunpack.c.l.b16 %v1305
    %v1665 = vunpack.c.h.b16 %v1305
    %v1666 = vunpack.c.l.b16 %v1306
    %v1667 = vunpack.c.h.b16 %v1306
    %v1668 = vunpack.c.l.b16 %v1307
    %v1669 = vunpack.c.h.b16 %v1307
    %v1670 = vunpack.c.l.b16 %v1308
    %v1671 = vunpack.c.h.b16 %v1308
    %v1672 = vunpack.c.l.b16 %v1309
    %v1673 = vunpack.c.h.b16 %v1309
    %v1674 = vunpack.c.l.b16 %v1310
    %v1675 = vunpack.c.h.b16 %v1310
    %v1676 = vunpack.c.l.b16 %v1311
    %v1677 = vunpack.c.h.b16 %v1311
    %v1678 = vunpack.c.l.b16 %v1312
    %v1679 = vunpack.c.h.b16 %v1312
    %v1680 = vunpack.c.l.b16 %v1313
    %v1681 = vunpack.c.h.b16 %v1313
    %v1682 = vunpack.c.l.b16 %v1314
    %v1683 = vunpack.c.h.b16 %v1314
    %v1684 = vunpack.c.l.b16 %v1315
    %v1685 = vunpack.c.h.b16 %v1315
    %v1686 = vunpack.c.l.b16 %v1316
    %v1687 = vunpack.c.h.b16 %v1316
    %v1688 = vunpack.c.l.b16 %v1317
    %v1689 = vunpack.c.h.b16 %v1317
    %v1690 = vunpack.c.l.b16 %v1318
    %v1691 = vunpack.c.h.b16 %v1318
    %v1692 = vunpack.c.l.b16 %v1319
    %v1693 = vunpack.c.h.b16 %v1319
    %v1694 = vunpack.c.l.b16 %v1320
    %v1695 = vunpack.c.h.b16 %v1320
    %v1696 = vunpack.c.l.b16 %v1321
    %v1697 = vunpack.c.h.b16 %v1321
    %v1698 = vunpack.c.l.b16 %v1322
    %v1699 = vunpack.c.h.b16 %v1322
    %v1700 = vunpack.c.l.b16 %v1323
    %v1701 = vunpack.c.h.b16 %v1323
    %v1702 = vunpack.c.l.b16 %v1324
    %v1703 = vunpack.c.h.b16 %v1324
    %v1704 = vunpack.c.l.b16 %v1325
    %v1705 = vunpack.c.h.b16 %v1325
    %v1706 = vunpack.c.l.b16 %v1326
    %v1707 = vunpack.c.h.b16 %v1326
    %v1708 = vunpack.c.l.b16 %v1327
    %v1709 = vunpack.c.h.b16 %v1327
    %v1710 = vunpack.c.l.b16 %v1328
    %v1711 = vunpack.c.h.b16 %v1328
    %v1712 = vunpack.c.l.b16 %v1329
    %v1713 = vunpack.c.h.b16 %v1329
    %v1714 = vunpack.c.l.b16 %v1330
    %v1715 = vunpack.c.h.b16 %v1330
    %v1716 = vunpack.c.l.b16 %v1331
    %v1717 = vunpack.c.h.b16 %v1331
    %v1718 = vunpack.c.l.b16 %v1332
    %v1719 = vunpack.c.h.b16 %v1332
    %v1720 = vunpack.c.l.b16 %v1333
    %v1721 = vunpack.c.h.b16 %v1333
    %v1722 = vunpack.c.l.b16 %v1334
    %v1723 = vunpack.c.h.b16 %v1334
    %v1724 = vunpack.c.l.b16 %v1335
    %v1725 = vunpack.c.h.b16 %v1335
    %v1726 = vunpack.c.l.b16 %v1336
    %v1727 = vunpack.c.h.b16 %v1336
    %v1728 = vunpack.c.l.b16 %v1337
    %v1729 = vunpack.c.h.b16 %v1337
    %v1730 = vunpack.c.l.b16 %v1338
    %v1731 = vunpack.c.h.b16 %v1338
    %v1732 = vunpack.c.l.b16 %v1339
    %v1733 = vunpack.c.h.b16 %v1339
    %v1734 = vunpack.c.l.b16 %v1340
    %v1735 = vunpack.c.h.b16 %v1340
    %v1736 = vunpack.c.l.b16 %v1341
    %v1737 = vunpack.c.h.b16 %v1341
    %v1738 = vunpack.c.l.b16 %v1342
    %v1739 = vunpack.c.h.b16 %v1342
    %v1740 = vunpack.c.l.b16 %v1343
    %v1741 = vunpack.c.h.b16 %v1343
    %v1742 = vunpack.c.l.b16 %v1344
    %v1743 = vunpack.c.h.b16 %v1344
    %v1744 = vunpack.c.l.b16 %v1345
    %v1745 = vunpack.c.h.b16 %v1345
    %v1746 = vunpack.c.l.b16 %v1346
    %v1747 = vunpack.c.h.b16 %v1346
    %v1748 = vunpack.c.l.b16 %v1347
    %v1749 = vunpack.c.h.b16 %v1347
    %v1750 = vunpack.c.l.b16 %v1348
    %v1751 = vunpack.c.h.b16 %v1348
    %v1752 = vunpack.c.l.b16 %v1349
    %v1753 = vunpack.c.h.b16 %v1349
    %v1754 = vunpack.c.l.b16 %v1350
    %v1755 = vunpack.c.h.b16 %v1350
    %v1756 = vunpack.c.l.b16 %v1351
    %v1757 = vunpack.c.h.b16 %v1351
    %v1758 = vpack.c.b16 %v1506, %v1502
    %v1759 = vpack.c.b16 %v1507, %v1503
    %v1760 = vpack.c.b16 %v1508, %v1504
    %v1761 = vpack.c.b16 %v1509, %v1505
    %v1762 = vpack.c.b16 %v1514, %v1510
    %v1763 = vpack.c.b16 %v1515, %v1511
    %v1764 = vpack.c.b16 %v1516, %v1512
    %v1765 = vpack.c.b16 %v1517, %v1513
    %v1766 = vpack.c.b16 %v1522, %v1518
    %v1767 = vpack.c.b16 %v1523, %v1519
    %v1768 = vpack.c.b16 %v1524, %v1520
    %v1769 = vpack.c.b16 %v1525, %v1521
    %v1770 = vpack.c.b16 %v1530, %v1526
    %v1771 = vpack.c.b16 %v1531, %v1527
    %v1772 = vpack.c.b16 %v1532, %v1528
    %v1773 = vpack.c.b16 %v1533, %v1529
    %v1774 = vpack.c.b16 %v1538, %v1534
    %v1775 = vpack.c.b16 %v1539, %v1535
    %v1776 = vpack.c.b16 %v1540, %v1536
    %v1777 = vpack.c.b16 %v1541, %v1537
    %v1778 = vpack.c.b16 %v1546, %v1542
    %v1779 = vpack.c.b16 %v1547, %v1543
    %v1780 = vpack.c.b16 %v1548, %v1544
    %v1781 = vpack.c.b16 %v1549, %v1545
    %v1782 = vpack.c.b16 %v1554, %v1550
    %v1783 = vpack.c.b16 %v1555, %v1551
    %v1784 = vpack.c.b16 %v1556, %v1552
    %v1785 = vpack.c.b16 %v1557, %v1553
    %v1786 = vpack.c.b16 %v1562, %v1558
    %v1787 = vpack.c.b16 %v1563, %v1559
    %v1788 = vpack.c.b16 %v1564, %v1560
    %v1789 = vpack.c.b16 %v1565, %v1561
    %v1790 = vpack.c.b16 %v1570, %v1566
    %v1791 = vpack.c.b16 %v1571, %v1567
    %v1792 = vpack.c.b16 %v1572, %v1568
    %v1793 = vpack.c.b16 %v1573, %v1569
    %v1794 = vpack.c.b16 %v1578, %v1574
    %v1795 = vpack.c.b16 %v1579, %v1575
    %v1796 = vpack.c.b16 %v1580, %v1576
    %v1797 = vpack.c.b16 %v1581, %v1577
    %v1798 = vpack.c.b16 %v1586, %v1582
    %v1799 = vpack.c.b16 %v1587, %v1583
    %v1800 = vpack.c.b16 %v1588, %v1584
    %v1801 = vpack.c.b16 %v1589, %v1585
    %v1802 = vpack.c.b16 %v1594, %v1590
    %v1803 = vpack.c.b16 %v1595, %v1591
    %v1804 = vpack.c.b16 %v1596, %v1592
    %v1805 = vpack.c.b16 %v1597, %v1593
    %v1806 = vpack.c.b16 %v1602, %v1598
    %v1807 = vpack.c.b16 %v1603, %v1599
    %v1808 = vpack.c.b16 %v1604, %v1600
    %v1809 = vpack.c.b16 %v1605, %v1601
    %v1810 = vpack.c.b16 %v1610, %v1606
    %v1811 = vpack.c.b16 %v1611, %v1607
    %v1812 = vpack.c.b16 %v1612, %v1608
    %v1813 = vpack.c.b16 %v1613, %v1609
    %v1814 = vpack.c.b16 %v1618, %v1614
    %v1815 = vpack.c.b16 %v1619, %v1615
    %v1816 = vpack.c.b16 %v1620, %v1616
    %v1817 = vpack.c.b16 %v1621, %v1617
    %v1818 = vpack.c.b16 %v1626, %v1622
    %v1819 = vpack.c.b16 %v1627, %v1623
    %v1820 = vpack.c.b16 %v1628, %v1624
    %v1821 = vpack.c.b16 %v1629, %v1625
    %v1822 = vpack.c.b16 %v1634, %v1630
    %v1823 = vpack.c.b16 %v1635, %v1631
    %v1824 = vpack.c.b16 %v1636, %v1632
    %v1825 = vpack.c.b16 %v1637, %v1633
    %v1826 = vpack.c.b16 %v1642, %v1638
    %v1827 = vpack.c.b16 %v1643, %v1639
    %v1828 = vpack.c.b16 %v1644, %v1640
    %v1829 = vpack.c.b16 %v1645, %v1641
    %v1830 = vpack.c.b16 %v1650, %v1646
    %v1831 = vpack.c.b16 %v1651, %v1647
    %v1832 = vpack.c.b16 %v1652, %v1648
    %v1833 = vpack.c.b16 %v1653, %v1649
    %v1834 = vpack.c.b16 %v1658, %v1654
    %v1835 = vpack.c.b16 %v1659, %v1655
    %v1836 = vpack.c.b16 %v1660, %v1656
    %v1837 = vpack.c.b16 %v1661, %v1657
    %v1838 = vpack.c.b16 %v1666, %v1662
    %v1839 = vpack.c.b16 %v1667, %v1663
    %v1840 = vpack.c.b16 %v1668, %v1664
    %v1841 = vpack.c.b16 %v1669, %v1665
    %v1842 = vpack.c.b16 %v1674, %v1670
    %v1843 = vpack.c.b16 %v1675, %v1671
    %v1844 = vpack.c.b16 %v1676, %v1672
    %v1845 = vpack.c.b16 %v1677, %v1673
    %v1846 = vpack.c.b16 %v1682, %v1678
    %v1847 = vpack.c.b16 %v1683, %v1679
    %v1848 = vpack.c.b16 %v1684, %v1680
    %v1849 = vpack.c.b16 %v1685, %v1681
    %v1850 = vpack.c.b16 %v1690, %v1686
    %v1851 = vpack.c.b16 %v1691, %v1687
    %v1852 = vpack.c.b16 %v1692, %v1688
    %v1853 = vpack.c.b16 %v1693, %v1689
    %v1854 = vpack.c.b16 %v1698, %v1694
    %v1855 = vpack.c.b16 %v1699, %v1695
    %v1856 = vpack.c.b16 %v1700, %v1696
    %v1857 = vpack.c.b16 %v1701, %v1697
    %v1858 = vpack.c.b16 %v1706, %v1702
    %v1859 = vpack.c.b16 %v1707, %v1703
    %v1860 = vpack.c.b16 %v1708, %v1704
    %v1861 = vpack.c.b16 %v1709, %v1705
    %v1862 = vpack.c.b16 %v1714, %v1710
    %v1863 = vpack.c.b16 %v1715, %v1711
    %v1864 = vpack.c.b16 %v1716, %v1712
    %v1865 = vpack.c.b16 %v1717, %v1713
    %v1866 = vpack.c.b16 %v1722, %v1718
    %v1867 = vpack.c.b16 %v1723, %v1719
    %v1868 = vpack.c.b16 %v1724, %v1720
    %v1869 = vpack.c.b16 %v1725, %v1721
    %v1870 = vpack.c.b16 %v1730, %v1726
    %v1871 = vpack.c.b16 %v1731, %v1727
    %v1872 = vpack.c.b16 %v1732, %v1728
    %v1873 = vpack.c.b16 %v1733, %v1729
    %v1874 = vpack.c.b16 %v1738, %v1734
    %v1875 = vpack.c.b16 %v1739, %v1735
    %v1876 = vpack.c.b16 %v1740, %v1736
    %v1877 = vpack.c.b16 %v1741, %v1737
    %v1878 = vpack.c.b16 %v1746, %v1742
    %v1879 = vpack.c.b16 %v1747, %v1743
    %v1880 = vpack.c.b16 %v1748, %v1744
    %v1881 = vpack.c.b16 %v1749, %v1745
    %v1882 = vpack.c.b16 %v1754, %v1750
    %v1883 = vpack.c.b16 %v1755, %v1751
    %v1884 = vpack.c.b16 %v1756, %v1752
    %v1885 = vpack.c.b16 %v1757, %v1753
    %2014 = vmatprep.subr.bf16.mxu0 %v1759
    %2015 = vmatpush1.bf16.msra.mxu0 %v1758
    %2016 = vmatprep.subr.bf16.mxu0 %v1763
    %2017 = vmatpush1.bf16.msra.mxu0 %v1762
    %2018 = vmatprep.subr.bf16.mxu0 %v1767
    %2019 = vmatpush1.bf16.msra.mxu0 %v1766
    %2020 = vmatprep.subr.bf16.mxu0 %v1771
    %2021 = vmatpush1.bf16.msra.mxu0 %v1770
    %2022 = vmatprep.subr.bf16.mxu0 %v1775
    %2023 = vmatpush1.bf16.msra.mxu0 %v1774
    %2024 = vmatprep.subr.bf16.mxu0 %v1779
    %2025 = vmatpush1.bf16.msra.mxu0 %v1778
    %2026 = vmatprep.subr.bf16.mxu0 %v1783
    %2027 = vmatpush1.bf16.msra.mxu0 %v1782
    %2028 = vmatprep.subr.bf16.mxu0 %v1787
    %2029 = vmatpush1.bf16.msra.mxu0 %v1786
    %2030 = vmatprep.subr.bf16.mxu0 %v1791
    %2031 = vmatpush1.bf16.msra.mxu0 %v1790
    %2032 = vmatprep.subr.bf16.mxu0 %v1795
    %2033 = vmatpush1.bf16.msra.mxu0 %v1794
    %2034 = vmatprep.subr.bf16.mxu0 %v1799
    %2035 = vmatpush1.bf16.msra.mxu0 %v1798
    %2036 = vmatprep.subr.bf16.mxu0 %v1803
    %2037 = vmatpush1.bf16.msra.mxu0 %v1802
    %2038 = vmatprep.subr.bf16.mxu0 %v1807
    %2039 = vmatpush1.bf16.msra.mxu0 %v1806
    %2040 = vmatprep.subr.bf16.mxu0 %v1811
    %2041 = vmatpush1.bf16.msra.mxu0 %v1810
    %2042 = vmatprep.subr.bf16.mxu0 %v1815
    %2043 = vmatpush1.bf16.msra.mxu0 %v1814
    %2044 = vmatprep.subr.bf16.mxu0 %v1819
    %2045 = vmatpush1.bf16.msra.mxu0 %v1818
    %2046 = vmatprep.mubr.bf16.mxu0 %v1221
    %2047 = vmatmul.mubr.bf16.gmra.mrb[0].mxu0 %v1220
    %v2048 = vpop.f32.mrb[0].mxu0
    %v2049 = vadd.f32 %v1357, %v2048
    %v2050 = vpop.f32.mrb[0].mxu0
    %v2051 = vadd.f32 %v1361, %v2050
    %v2052 = vpop.f32.mrb[0].mxu0
    %v2053 = vpop.f32.mrb[0].mxu0
    %2054 = vdwg.mxu0
    %2055 = vmatprep.subr.bf16.mxu0 %v1823
    %2056 = vmatpush1.bf16.msra.mxu0 %v1822
    %2057 = vmatprep.subr.bf16.mxu0 %v1827
    %2058 = vmatpush1.bf16.msra.mxu0 %v1826
    %2059 = vmatprep.subr.bf16.mxu0 %v1831
    %2060 = vmatpush1.bf16.msra.mxu0 %v1830
    %2061 = vmatprep.subr.bf16.mxu0 %v1835
    %2062 = vmatpush1.bf16.msra.mxu0 %v1834
    %2063 = vmatprep.subr.bf16.mxu0 %v1839
    %2064 = vmatpush1.bf16.msra.mxu0 %v1838
    %2065 = vmatprep.subr.bf16.mxu0 %v1843
    %2066 = vmatpush1.bf16.msra.mxu0 %v1842
    %2067 = vmatprep.subr.bf16.mxu0 %v1847
    %2068 = vmatpush1.bf16.msra.mxu0 %v1846
    %2069 = vmatprep.subr.bf16.mxu0 %v1851
    %2070 = vmatpush1.bf16.msra.mxu0 %v1850
    %2071 = vmatprep.subr.bf16.mxu0 %v1855
    %2072 = vmatpush1.bf16.msra.mxu0 %v1854
    %2073 = vmatprep.subr.bf16.mxu0 %v1859
    %2074 = vmatpush1.bf16.msra.mxu0 %v1858
    %2075 = vmatprep.subr.bf16.mxu0 %v1863
    %2076 = vmatpush1.bf16.msra.mxu0 %v1862
    %2077 = vmatprep.subr.bf16.mxu0 %v1867
    %2078 = vmatpush1.bf16.msra.mxu0 %v1866
    %2079 = vmatprep.subr.bf16.mxu0 %v1871
    %2080 = vmatpush1.bf16.msra.mxu0 %v1870
    %2081 = vmatprep.subr.bf16.mxu0 %v1875
    %2082 = vmatpush1.bf16.msra.mxu0 %v1874
    %2083 = vmatprep.subr.bf16.mxu0 %v1879
    %2084 = vmatpush1.bf16.msra.mxu0 %v1878
    %2085 = vmatprep.subr.bf16.mxu0 %v1883
    %2086 = vmatpush1.bf16.msra.mxu0 %v1882
    %2087 = vmatprep.mubr.bf16.mxu0 %v1223
    %2088 = vmatmul.mubr.bf16.gmra.mrb[0].mxu0 %v1222
    %v2089 = vpop.f32.mrb[0].mxu0
    %v2090 = vadd.f32 %v2049, %v2089
    %v2091 = vpop.f32.mrb[0].mxu0
    %v2092 = vadd.f32 %v2051, %v2091
    %v2093 = vpop.f32.mrb[0].mxu0
    %v2094 = vpop.f32.mrb[0].mxu0
    %2095 = vdwg.mxu0
    %2096 = vmatprep.subr.bf16.mxu0 %v1761
    %2097 = vmatpush1.bf16.msra.mxu0 %v1760
    %2098 = vmatprep.subr.bf16.mxu0 %v1765
    %2099 = vmatpush1.bf16.msra.mxu0 %v1764
    %2100 = vmatprep.subr.bf16.mxu0 %v1769
    %2101 = vmatpush1.bf16.msra.mxu0 %v1768
    %2102 = vmatprep.subr.bf16.mxu0 %v1773
    %2103 = vmatpush1.bf16.msra.mxu0 %v1772
    %2104 = vmatprep.subr.bf16.mxu0 %v1777
    %2105 = vmatpush1.bf16.msra.mxu0 %v1776
    %2106 = vmatprep.subr.bf16.mxu0 %v1781
    %2107 = vmatpush1.bf16.msra.mxu0 %v1780
    %2108 = vmatprep.subr.bf16.mxu0 %v1785
    %2109 = vmatpush1.bf16.msra.mxu0 %v1784
    %2110 = vmatprep.subr.bf16.mxu0 %v1789
    %2111 = vmatpush1.bf16.msra.mxu0 %v1788
    %2112 = vmatprep.subr.bf16.mxu0 %v1793
    %2113 = vmatpush1.bf16.msra.mxu0 %v1792
    %2114 = vmatprep.subr.bf16.mxu0 %v1797
    %2115 = vmatpush1.bf16.msra.mxu0 %v1796
    %2116 = vmatprep.subr.bf16.mxu0 %v1801
    %2117 = vmatpush1.bf16.msra.mxu0 %v1800
    %2118 = vmatprep.subr.bf16.mxu0 %v1805
    %2119 = vmatpush1.bf16.msra.mxu0 %v1804
    %2120 = vmatprep.subr.bf16.mxu0 %v1809
    %2121 = vmatpush1.bf16.msra.mxu0 %v1808
    %2122 = vmatprep.subr.bf16.mxu0 %v1813
    %2123 = vmatpush1.bf16.msra.mxu0 %v1812
    %2124 = vmatprep.subr.bf16.mxu0 %v1817
    %2125 = vmatpush1.bf16.msra.mxu0 %v1816
    %2126 = vmatprep.subr.bf16.mxu0 %v1821
    %2127 = vmatpush1.bf16.msra.mxu0 %v1820
    %2128 = vmatprep.mubr.bf16.mxu0 %v1221
    %2129 = vmatmul.mubr.bf16.gmra.mrb[0].mxu0 %v1220
    %v2130 = vpop.f32.mrb[0].mxu0
    %v2131 = vadd.f32 %v1365, %v2130
    %v2132 = vpop.f32.mrb[0].mxu0
    %v2133 = vadd.f32 %v1369, %v2132
    %v2134 = vpop.f32.mrb[0].mxu0
    %v2135 = vpop.f32.mrb[0].mxu0
    %2136 = vdwg.mxu0
    %2137 = vmatprep.subr.bf16.mxu0 %v1825
    %2138 = vmatpush1.bf16.msra.mxu0 %v1824
    %2139 = vmatprep.subr.bf16.mxu0 %v1829
    %2140 = vmatpush1.bf16.msra.mxu0 %v1828
    %2141 = vmatprep.subr.bf16.mxu0 %v1833
    %2142 = vmatpush1.bf16.msra.mxu0 %v1832
    %2143 = vmatprep.subr.bf16.mxu0 %v1837
    %2144 = vmatpush1.bf16.msra.mxu0 %v1836
    %2145 = vmatprep.subr.bf16.mxu0 %v1841
    %2146 = vmatpush1.bf16.msra.mxu0 %v1840
    %2147 = vmatprep.subr.bf16.mxu0 %v1845
    %2148 = vmatpush1.bf16.msra.mxu0 %v1844
    %2149 = vmatprep.subr.bf16.mxu0 %v1849
    %2150 = vmatpush1.bf16.msra.mxu0 %v1848
    %2151 = vmatprep.subr.bf16.mxu0 %v1853
    %2152 = vmatpush1.bf16.msra.mxu0 %v1852
    %2153 = vmatprep.subr.bf16.mxu0 %v1857
    %2154 = vmatpush1.bf16.msra.mxu0 %v1856
    %2155 = vmatprep.subr.bf16.mxu0 %v1861
    %2156 = vmatpush1.bf16.msra.mxu0 %v1860
    %2157 = vmatprep.subr.bf16.mxu0 %v1865
    %2158 = vmatpush1.bf16.msra.mxu0 %v1864
    %2159 = vmatprep.subr.bf16.mxu0 %v1869
    %2160 = vmatpush1.bf16.msra.mxu0 %v1868
    %2161 = vmatprep.subr.bf16.mxu0 %v1873
    %2162 = vmatpush1.bf16.msra.mxu0 %v1872
    %2163 = vmatprep.subr.bf16.mxu0 %v1877
    %2164 = vmatpush1.bf16.msra.mxu0 %v1876
    %2165 = vmatprep.subr.bf16.mxu0 %v1881
    %2166 = vmatpush1.bf16.msra.mxu0 %v1880
    %2167 = vmatprep.subr.bf16.mxu0 %v1885
    %2168 = vmatpush1.bf16.msra.mxu0 %v1884
    %2169 = vmatprep.mubr.bf16.mxu0 %v1223
    %2170 = vmatmul.mubr.bf16.gmra.mrb[0].mxu0 %v1222
    %v2171 = vpop.f32.mrb[0].mxu0
    %v2172 = vadd.f32 %v2131, %v2171
    %v2173 = vpop.f32.mrb[0].mxu0
    %v2174 = vadd.f32 %v2133, %v2173
    %v2175 = vpop.f32.mrb[0].mxu0
    %v2176 = vpop.f32.mrb[0].mxu0
    %2177 = vdwg.mxu0
    %v2178 = vmul.f32 %v2090, 0.2
    %v2179 = vmul.f32 %v2092, 0.2
    %v2180 = vmul.f32 %v2172, 0.2
    %v2181 = vmul.f32 %v2174, 0.2
    %v2182 = vmax.f32 %v2090, %v2178
    %v2183 = vmax.f32 %v2092, %v2179
    %v2184 = vmax.f32 %v2172, %v2180
    %v2185 = vmax.f32 %v2174, %v2181
    %v2186 = vld [vmem:[%s7] sm:$0xf]
    %v2188 = vlaneseq
    %v2189 = vshrl.u32 %v2188, 7
    %v2190 = vsub.s32 0, %v2189
    %v2191 = vrot.slane %v2186, %v2190
    %v2192 = vlaneseq
    %v2193 = vshrl.u32 %v2192, 7
    %v2194 = vsub.s32 1, %v2193
    %v2195 = vrot.slane %v2186, %v2194
    %v2196 = vlaneseq
    %v2197 = vshrl.u32 %v2196, 7
    %v2198 = vsub.s32 2, %v2197
    %v2199 = vrot.slane %v2186, %v2198
    %v2200 = vlaneseq
    %v2201 = vshrl.u32 %v2200, 7
    %v2202 = vsub.s32 3, %v2201
    %v2203 = vrot.slane %v2186, %v2202
    %v2208 = vmul.f32 %v2182, %v2191
    %v2209 = vmul.f32 %v2183, %v2195
    %v2210 = vmul.f32 %v2184, %v2199
    %v2211 = vmul.f32 %v2185, %v2203
    %v2212 = vadd.f32 %v2208, %v2209
    %v2213 = vadd.f32 %v2212, %v2210
    %v2214 = vadd.f32 %v2213, %v2211
    %2215 = vadd.xlane.f32.xlu0 %v2214
    %v2216 = vpop.xlane.xlu0 %2215
    %v2217 = vld [vmem:[#allocation2] sm:$0x1]
    %v2219 = vlaneseq
    %v2220 = vshrl.u32 %v2219, 7
    %v2221 = vsub.s32 0, %v2220
    %v2222 = vrot.slane %v2217, %v2221
    %v2224 = vadd.f32 %v2216, %v2222
    %vm2225 = vcmask 7168
    %2226 = vst.msk [vmem:[%s9] sm:$0xff] %vm2225, %v2224
    // Predicated region
    $region54: #{tpu_custom_call.1} parent=1 // pred_check
      _
    $region55: #{tpu_custom_call.1} parent=1 // pred_check_branch
      %2228 = sbr.rel (0) target = $region57
    $region56: #{tpu_custom_call.1} parent=1 // pred_region
      _
    $region57: #{tpu_custom_call.1} parent=1 // pred_fallthru
      _
    // Predicated region
    $region58: #{tpu_custom_call.1} parent=1 // pred_check
      _
    $region59: #{tpu_custom_call.1} parent=1 // pred_check_branch
      %2230 = sbr.rel (0) target = $region61
    $region60: #{tpu_custom_call.1} parent=1 // pred_region
      _
    $region61: #{tpu_custom_call.1} parent=1 // pred_fallthru
      _
    %2231 = vsyncpa [#allocation4], 1
    %2232 = vsyncpa [#allocation6], 1
    %2233 = vsyncpa [#allocation9], 1

</llo_original>
